<compile_context>
chip_gen: v7x
topology: tpu7x:2x2x1
jax: 0.10.0
libtpu: 0.0.40
codegen_flags: <defaults>
</compile_context>

<pallas_src>
import functools

import jax
import jax.numpy as jnp
from jax.experimental import pallas as pl
from jax.experimental.pallas import tpu as pltpu

LANE = 128
NVEC = 16  # rows in the packed bias/gamma/beta block (10 used, padded to 16)


def _round_up(n, m):
    return ((n + m - 1) // m) * m


def _encoder_layer_kernel(
    x_ref, w_ref, vec_ref, o_ref,
    *, num_heads, head_dim, d_model, d_model_p, d_ff_p, eps,
):
    Dp = d_model_p
    Fp = d_ff_p
    x = x_ref[...]                       # (S, Dp) — batch dim squeezed by BlockSpec
    S = x.shape[0]
    hdp = Dp // num_heads                # padded per-head dim

    # Mask of the real (unpadded) d_model lanes.
    lane = jax.lax.broadcasted_iota(jnp.int32, (1, Dp), 1)
    lane_mask = (lane < d_model).astype(jnp.float32)

    def vec(row, width):
        # Row `row` of the packed vector block, trimmed to `width` lanes.
        return vec_ref[row:row + 1, 0:width]

    def layer_norm(v, gamma, beta):
        # torch.Tensor.std default is unbiased (N-1); normalize by (std + eps).
        vm = v * lane_mask
        mean = jnp.sum(vm, axis=-1, keepdims=True) / d_model
        diff = (v - mean) * lane_mask
        var = jnp.sum(diff * diff, axis=-1, keepdims=True) / (d_model - 1)
        std = jnp.sqrt(var)
        # gamma/beta are zero on padded lanes -> padded lanes stay exactly 0.
        return gamma * (v - mean) / (std + eps) + beta

    # ---- sublayer 0: x + SelfAttn(LayerNorm(x)) ----
    xn = layer_norm(x, vec(6, Dp), vec(7, Dp))

    # Fused QKV projection: (S, Dp) @ (Dp, 3*Dp); lane-aligned splits afterwards.
    wqkv = w_ref[0:Dp, 0:3 * Dp]
    qkv = jnp.dot(xn, wqkv, preferred_element_type=jnp.float32)
    q = (qkv[:, 0 * Dp:1 * Dp] + vec(0, Dp)).reshape(S, num_heads, hdp)
    k = (qkv[:, 1 * Dp:2 * Dp] + vec(1, Dp)).reshape(S, num_heads, hdp)
    v = (qkv[:, 2 * Dp:3 * Dp] + vec(2, Dp)).reshape(S, num_heads, hdp)

    # Head-batched attention (padded head dims are exactly zero -> no effect).
    scale = 1.0 / (head_dim ** 0.5)
    s = jnp.einsum("qhd,khd->hqk", q, k, preferred_element_type=jnp.float32) * scale
    s = s - jnp.max(s, axis=-1, keepdims=True)
    p = jnp.exp(s)
    p = p * pl.reciprocal(jnp.sum(p, axis=-1, keepdims=True), approx=True)
    ao = jnp.einsum("hqk,khd->qhd", p, v,
                    preferred_element_type=jnp.float32).reshape(S, Dp)

    wo = w_ref[0:Dp, 3 * Dp:4 * Dp]
    attn = jnp.dot(ao, wo, preferred_element_type=jnp.float32) + vec(3, Dp)
    x1 = x + attn                        # padded lanes stay exactly 0

    # ---- sublayer 1: x1 + FFN(LayerNorm(x1)) ----
    xn2 = layer_norm(x1, vec(8, Dp), vec(9, Dp))
    w1 = w_ref[0:Dp, 4 * Dp:4 * Dp + Fp]
    h1 = jnp.dot(xn2, w1, preferred_element_type=jnp.float32) + vec(4, Fp)
    h1 = jnp.maximum(h1, 0.0)
    w2 = w_ref[0:Fp, 4 * Dp + Fp:5 * Dp + Fp]
    ff = jnp.dot(h1, w2, preferred_element_type=jnp.float32) + vec(5, Dp)

    o_ref[...] = x1 + ff                 # lane-dense (S, 128) store


# ---------------- wrapper-side packing helpers ----------------

def _pad2(a, rows, cols):
    r, c = a.shape
    return jnp.pad(a, ((0, rows - r), (0, cols - c)))


def _pad_qkv_weight(w, num_heads, hd, hdp, Dp):
    # (D, H*hd) -> (Dp, H*hdp): pad input rows and each head's output cols.
    D = w.shape[0]
    w3 = w.reshape(D, num_heads, hd)
    w3 = jnp.pad(w3, ((0, Dp - D), (0, 0), (0, hdp - hd)))
    return w3.reshape(Dp, num_heads * hdp)


def _pad_qkv_bias(b, num_heads, hd, hdp):
    # (1, H*hd) -> (1, H*hdp)
    b3 = b.reshape(1, num_heads, hd)
    b3 = jnp.pad(b3, ((0, 0), (0, 0), (0, hdp - hd)))
    return b3.reshape(1, num_heads * hdp)


def _pad_out_weight(w, num_heads, hd, hdp, Dp):
    # (H*hd, D) -> (H*hdp, Dp): pad each head's input rows and the output cols.
    D = w.shape[1]
    w3 = w.reshape(num_heads, hd, D)
    w3 = jnp.pad(w3, ((0, 0), (0, hdp - hd), (0, Dp - D)))
    return w3.reshape(num_heads * hdp, Dp)


def encoder_layer_pallas(x, params, *, num_heads):
    B, S, D = x.shape
    F = params["w1"].shape[1]
    assert D % num_heads == 0
    head_dim = D // num_heads

    Dp = _round_up(D, LANE)
    Fp = _round_up(F, LANE)
    assert Dp % num_heads == 0, "padded d_model must stay divisible by num_heads"
    hdp = Dp // num_heads
    Rmax = max(Dp, Fp)      # shared row count of the packed weight block
    Wmax = max(Dp, Fp)      # shared lane width of the packed vector block

    # ---- zero padding to a lane-dense layout ----
    x_p = jnp.pad(x, ((0, 0), (0, 0), (0, Dp - D)))

    wqkv = jnp.concatenate(
        [_pad_qkv_weight(params[n], num_heads, head_dim, hdp, Dp)
         for n in ("wq", "wk", "wv")], axis=1)                        # (Dp, 3*Dp)
    wo = _pad_out_weight(params["wo"], num_heads, head_dim, hdp, Dp)  # (Dp, Dp)
    w1 = _pad2(params["w1"], Dp, Fp)                                  # (Dp, Fp)
    w2 = _pad2(params["w2"], Fp, Dp)                                  # (Fp, Dp)

    def pad_rows(a):
        return jnp.pad(a, ((0, Rmax - a.shape[0]), (0, 0)))

    # One packed weight block: columns [wqkv | wo | w1 | w2] = (Rmax, 5*Dp+Fp)
    w_pack = jnp.concatenate(
        [pad_rows(wqkv), pad_rows(wo), pad_rows(w1), pad_rows(w2)], axis=1)

    # One packed vector block: rows [bq,bk,bv,bo,b1,b2,g1,be1,g2,be2] padded to 16.
    rows = [
        _pad2(_pad_qkv_bias(params["bq"], num_heads, head_dim, hdp), 1, Wmax),
        _pad2(_pad_qkv_bias(params["bk"], num_heads, head_dim, hdp), 1, Wmax),
        _pad2(_pad_qkv_bias(params["bv"], num_heads, head_dim, hdp), 1, Wmax),
        _pad2(params["bo"], 1, Wmax),
        _pad2(params["b1"], 1, Wmax),
        _pad2(params["b2"], 1, Wmax),
        _pad2(params["ln1_g"], 1, Wmax),
        _pad2(params["ln1_b"], 1, Wmax),
        _pad2(params["ln2_g"], 1, Wmax),
        _pad2(params["ln2_b"], 1, Wmax),
    ]
    vec_pack = jnp.concatenate(
        rows + [jnp.zeros((NVEC - len(rows), Wmax), jnp.float32)], axis=0)

    in_specs = [
        pl.BlockSpec((None, S, Dp), lambda b: (b, 0, 0)),           # x (batch squeezed)
        pl.BlockSpec(w_pack.shape, lambda b: (0, 0)),               # packed weights
        pl.BlockSpec(vec_pack.shape, lambda b: (0, 0)),             # packed vectors
    ]
    out_specs = pl.BlockSpec((None, S, Dp), lambda b: (b, 0, 0))

    kernel = functools.partial(
        _encoder_layer_kernel,
        num_heads=num_heads, head_dim=head_dim, d_model=D,
        d_model_p=Dp, d_ff_p=Fp, eps=1e-6,
    )

    flops = int(2 * B * S * (4 * Dp * Dp + 2 * S * Dp + 2 * Dp * Fp))
    bytes_accessed = int(4 * (2 * B * S * Dp + w_pack.size + vec_pack.size))
    transcendentals = int(B * num_heads * S * S)

    out_p = pl.pallas_call(
        kernel,
        out_shape=jax.ShapeDtypeStruct((B, S, Dp), jnp.float32),
        grid_spec=pltpu.PrefetchScalarGridSpec(
            num_scalar_prefetch=0,
            grid=(B,),
            in_specs=in_specs,
            out_specs=out_specs,
        ),
        compiler_params=pltpu.CompilerParams(dimension_semantics=("parallel",)),
        cost_estimate=pl.CostEstimate(
            flops=flops, transcendentals=transcendentals,
            bytes_accessed=bytes_accessed),
    )(x_p, w_pack, vec_pack)
    return out_p[:, :, :D]


def encoder_layer_ref(x, params, *, num_heads):
    """Pure-JAX reference mirroring the PyTorch forward (eval mode)."""
    B, S, D = x.shape
    head_dim = D // num_heads
    eps = 1e-6

    def ln(v, g, b):
        mean = jnp.mean(v, axis=-1, keepdims=True)
        var = jnp.sum((v - mean) ** 2, axis=-1, keepdims=True) / (D - 1)
        return g * (v - mean) / (jnp.sqrt(var) + eps) + b

    xn = ln(x, params["ln1_g"][0], params["ln1_b"][0])
    q = xn @ params["wq"] + params["bq"][0]
    k = xn @ params["wk"] + params["bk"][0]
    v = xn @ params["wv"] + params["bv"][0]

    def split(t):
        return t.reshape(B, S, num_heads, head_dim).transpose(0, 2, 1, 3)

    qh, kh, vh = split(q), split(k), split(v)
    s = jnp.einsum("bhqd,bhkd->bhqk", qh, kh) / (head_dim ** 0.5)
    p = jax.nn.softmax(s, axis=-1)
    ao = jnp.einsum("bhqk,bhkd->bhqd", p, vh).transpose(0, 2, 1, 3).reshape(B, S, D)
    ao = ao @ params["wo"] + params["bo"][0]
    x1 = x + ao

    xn2 = ln(x1, params["ln2_g"][0], params["ln2_b"][0])
    h1 = jax.nn.relu(xn2 @ params["w1"] + params["b1"][0])
    ff = h1 @ params["w2"] + params["b2"][0]
    return x1 + ff


if __name__ == "__main__":
    # EncoderLayer(head=4, d_model=32, input_dim=64, dropout=0.1) — eval semantics.
    B, S, D, FF, H = 2, 8, 32, 64, 4

    key = jax.random.PRNGKey(0)
    ks = jax.random.split(key, 16)

    def w(k, shape, scale=0.05):
        return (scale * jax.random.normal(k, shape)).astype(jnp.float32)

    params = {
        "wq": w(ks[0], (D, D)), "bq": w(ks[1], (1, D)),
        "wk": w(ks[2], (D, D)), "bk": w(ks[3], (1, D)),
        "wv": w(ks[4], (D, D)), "bv": w(ks[5], (1, D)),
        "wo": w(ks[6], (D, D)), "bo": w(ks[7], (1, D)),
        "w1": w(ks[8], (D, FF)), "b1": w(ks[9], (1, FF)),
        "w2": w(ks[10], (FF, D)), "b2": w(ks[11], (1, D)),
        "ln1_g": jnp.ones((1, D), jnp.float32), "ln1_b": jnp.zeros((1, D), jnp.float32),
        "ln2_g": jnp.ones((1, D), jnp.float32), "ln2_b": jnp.zeros((1, D), jnp.float32),
    }

    x = jax.random.normal(ks[12], (B, S, D), dtype=jnp.float32)

    out = encoder_layer_pallas(x, params, num_heads=H)
    out = jax.block_until_ready(out)

    ref = encoder_layer_ref(x, params, num_heads=H)
    assert out.shape == (B, S, D)
    # Tolerance slightly loosened for pl.reciprocal(approx=True) in the softmax
    # denominator (EUP approximate reciprocal); everything else is exact f32.
    assert jnp.allclose(out, ref, atol=1e-3, rtol=1e-3), "mismatch vs reference"

    print("KERNEL_OK")
</pallas_src>

<mosaic_0001>
module attributes {stable_mosaic.version = 11 : i64} {
  func.func @_encoder_layer_kernel(%arg0: i32, %arg1: memref<1x8x128xf32, #tpu.memory_space<vmem>>, %arg2: memref<128x768xf32, #tpu.memory_space<vmem>>, %arg3: memref<16x128xf32, #tpu.memory_space<vmem>>, %arg4: memref<1x8x128xf32, #tpu.memory_space<vmem>>) attributes {dimension_semantics = [#tpu.dimension_semantics<parallel>], iteration_bounds = array<i64: 2>, scalar_prefetch = 0 : i64, scratch_operands = 0 : i64, tpu.core_type = #tpu.core_type<tc>, window_params = [{transform_indices = @transform_0, window_bounds = array<i64: 1, 8, 128>}, {pipeline_mode = #tpu.pipeline_mode<synchronous>, transform_indices = @transform_1, window_bounds = array<i64: 128, 768>}, {pipeline_mode = #tpu.pipeline_mode<synchronous>, transform_indices = @transform_2, window_bounds = array<i64: 16, 128>}, {transform_indices = @transform_3, window_bounds = array<i64: 1, 8, 128>}]} {
    %c0 = arith.constant 0 : index
    %c0_0 = arith.constant 0 : index
    %c0_1 = arith.constant 0 : index
    %0 = vector.load %arg1[%c0, %c0_0, %c0_1] : memref<1x8x128xf32, #tpu.memory_space<vmem>>, vector<1x8x128xf32>
    %1 = vector.shape_cast %0 : vector<1x8x128xf32> to vector<8x128xf32>
    %2 = tpu.iota {dimensions = array<i32: 1>} : vector<1x128xi32>
    %c32_i32 = arith.constant 32 : i32
    %3 = vector.broadcast %c32_i32 : i32 to vector<1x128xi32>
    %4 = arith.cmpi slt, %2, %3 : vector<1x128xi32>
    %5 = arith.extui %4 : vector<1x128xi1> to vector<1x128xi32>
    %6 = arith.sitofp %5 : vector<1x128xi32> to vector<1x128xf32>
    %c6 = arith.constant 6 : index
    %c0_2 = arith.constant 0 : index
    %7 = vector.load %arg3[%c6, %c0_2] : memref<16x128xf32, #tpu.memory_space<vmem>>, vector<1x128xf32>
    %c7 = arith.constant 7 : index
    %c0_3 = arith.constant 0 : index
    %8 = vector.load %arg3[%c7, %c0_3] : memref<16x128xf32, #tpu.memory_space<vmem>>, vector<1x128xf32>
    %9 = vector.broadcast %6 : vector<1x128xf32> to vector<8x128xf32>
    %10 = arith.mulf %1, %9 : vector<8x128xf32>
    %cst = arith.constant dense<0.000000e+00> : vector<8xf32>
    %11 = vector.multi_reduction <add>, %10, %cst [1] : vector<8x128xf32> to vector<8xf32>
    %12 = vector.shape_cast %11 : vector<8xf32> to vector<8x1xf32>
    %cst_4 = arith.constant 3.200000e+01 : f32
    %13 = vector.broadcast %cst_4 : f32 to vector<8x1xf32>
    %14 = arith.divf %12, %13 : vector<8x1xf32>
    %15 = vector.broadcast %14 : vector<8x1xf32> to vector<8x128xf32>
    %16 = arith.subf %1, %15 : vector<8x128xf32>
    %17 = vector.broadcast %6 : vector<1x128xf32> to vector<8x128xf32>
    %18 = arith.mulf %16, %17 : vector<8x128xf32>
    %19 = arith.mulf %18, %18 : vector<8x128xf32>
    %cst_5 = arith.constant dense<0.000000e+00> : vector<8xf32>
    %20 = vector.multi_reduction <add>, %19, %cst_5 [1] : vector<8x128xf32> to vector<8xf32>
    %21 = vector.shape_cast %20 : vector<8xf32> to vector<8x1xf32>
    %cst_6 = arith.constant 3.100000e+01 : f32
    %22 = vector.broadcast %cst_6 : f32 to vector<8x1xf32>
    %23 = arith.divf %21, %22 : vector<8x1xf32>
    %24 = math.sqrt %23 : vector<8x1xf32>
    %25 = vector.broadcast %14 : vector<8x1xf32> to vector<8x128xf32>
    %26 = arith.subf %1, %25 : vector<8x128xf32>
    %27 = vector.broadcast %7 : vector<1x128xf32> to vector<8x128xf32>
    %28 = arith.mulf %27, %26 : vector<8x128xf32>
    %cst_7 = arith.constant 9.99999997E-7 : f32
    %29 = vector.broadcast %cst_7 : f32 to vector<8x1xf32>
    %30 = arith.addf %24, %29 : vector<8x1xf32>
    %31 = vector.broadcast %30 : vector<8x1xf32> to vector<8x128xf32>
    %32 = arith.divf %28, %31 : vector<8x128xf32>
    %33 = vector.broadcast %8 : vector<1x128xf32> to vector<8x128xf32>
    %34 = arith.addf %32, %33 : vector<8x128xf32>
    %c0_8 = arith.constant 0 : index
    %c0_9 = arith.constant 0 : index
    %35 = vector.load %arg2[%c0_8, %c0_9] : memref<128x768xf32, #tpu.memory_space<vmem>>, vector<128x384xf32>
    %cst_10 = arith.constant dense<0.000000e+00> : vector<8x384xf32>
    %36 = tpu.matmul %34, %35, %cst_10 {dimension_numbers = #tpu.dot_dimension_numbers<[1], [0], [0], [1], [0, 0, 1, 1], [], []>} : vector<8x128xf32>, vector<128x384xf32>, vector<8x384xf32> -> vector<8x384xf32>
    %37 = vector.extract_strided_slice %36 {offsets = [0, 0], sizes = [8, 128], strides = [1, 1]} : vector<8x384xf32> to vector<8x128xf32>
    %c0_11 = arith.constant 0 : index
    %c0_12 = arith.constant 0 : index
    %38 = vector.load %arg3[%c0_11, %c0_12] : memref<16x128xf32, #tpu.memory_space<vmem>>, vector<1x128xf32>
    %39 = vector.broadcast %38 : vector<1x128xf32> to vector<8x128xf32>
    %40 = arith.addf %37, %39 : vector<8x128xf32>
    %41 = vector.shape_cast %40 : vector<8x128xf32> to vector<8x4x32xf32>
    %42 = vector.extract_strided_slice %36 {offsets = [0, 128], sizes = [8, 128], strides = [1, 1]} : vector<8x384xf32> to vector<8x128xf32>
    %c1 = arith.constant 1 : index
    %c0_13 = arith.constant 0 : index
    %43 = vector.load %arg3[%c1, %c0_13] : memref<16x128xf32, #tpu.memory_space<vmem>>, vector<1x128xf32>
    %44 = vector.broadcast %43 : vector<1x128xf32> to vector<8x128xf32>
    %45 = arith.addf %42, %44 : vector<8x128xf32>
    %46 = vector.shape_cast %45 : vector<8x128xf32> to vector<8x4x32xf32>
    %47 = vector.extract_strided_slice %36 {offsets = [0, 256], sizes = [8, 128], strides = [1, 1]} : vector<8x384xf32> to vector<8x128xf32>
    %c2 = arith.constant 2 : index
    %c0_14 = arith.constant 0 : index
    %48 = vector.load %arg3[%c2, %c0_14] : memref<16x128xf32, #tpu.memory_space<vmem>>, vector<1x128xf32>
    %49 = vector.broadcast %48 : vector<1x128xf32> to vector<8x128xf32>
    %50 = arith.addf %47, %49 : vector<8x128xf32>
    %51 = vector.shape_cast %50 : vector<8x128xf32> to vector<8x4x32xf32>
    "tpu.trace_start"() <{level = 10 : i32, message = "qhd,khd->hqk"}> : () -> ()
    %cst_15 = arith.constant dense<0.000000e+00> : vector<4x8x8xf32>
    %52 = tpu.matmul %41, %46, %cst_15 {dimension_numbers = #tpu.dot_dimension_numbers<[2], [2], [0], [0], [0, 1, 0, 0, 1, 0], [1], [1]>} : vector<8x4x32xf32>, vector<8x4x32xf32>, vector<4x8x8xf32> -> vector<4x8x8xf32>
    "tpu.trace_stop"() : () -> ()
    %cst_16 = arith.constant 0.353553385 : f32
    %53 = vector.broadcast %cst_16 : f32 to vector<4x8x8xf32>
    %54 = arith.mulf %52, %53 : vector<4x8x8xf32>
    %cst_17 = arith.constant dense<0xFF800000> : vector<4x8xf32>
    %55 = vector.multi_reduction <maximumf>, %54, %cst_17 [2] : vector<4x8x8xf32> to vector<4x8xf32>
    %56 = vector.shape_cast %55 : vector<4x8xf32> to vector<4x8x1xf32>
    %57 = vector.broadcast %56 : vector<4x8x1xf32> to vector<4x8x8xf32>
    %58 = arith.subf %54, %57 : vector<4x8x8xf32>
    %59 = math.exp %58 : vector<4x8x8xf32>
    %cst_18 = arith.constant dense<0.000000e+00> : vector<4x8xf32>
    %60 = vector.multi_reduction <add>, %59, %cst_18 [2] : vector<4x8x8xf32> to vector<4x8xf32>
    %61 = vector.shape_cast %60 : vector<4x8xf32> to vector<4x8x1xf32>
    %62 = tpu.reciprocal %61 {approx = true} : vector<4x8x1xf32> -> vector<4x8x1xf32>
    %63 = vector.broadcast %62 : vector<4x8x1xf32> to vector<4x8x8xf32>
    %64 = arith.mulf %59, %63 : vector<4x8x8xf32>
    "tpu.trace_start"() <{level = 10 : i32, message = "hqk,khd->qhd"}> : () -> ()
    %cst_19 = arith.constant dense<0.000000e+00> : vector<4x32x8xf32>
    %65 = tpu.matmul %51, %64, %cst_19 {dimension_numbers = #tpu.dot_dimension_numbers<[0], [2], [2], [1], [0, 1, 0, 2, 1, 1], [1], [0]>} : vector<8x4x32xf32>, vector<4x8x8xf32>, vector<4x32x8xf32> -> vector<4x32x8xf32>
    %66 = tpu.transpose %65, [2, 0, 1] : vector<4x32x8xf32> -> vector<8x4x32xf32>
    "tpu.trace_stop"() : () -> ()
    %67 = vector.shape_cast %66 : vector<8x4x32xf32> to vector<8x128xf32>
    %c0_20 = arith.constant 0 : index
    %c384 = arith.constant 384 : index
    %68 = vector.load %arg2[%c0_20, %c384] : memref<128x768xf32, #tpu.memory_space<vmem>>, vector<128x128xf32>
    %cst_21 = arith.constant dense<0.000000e+00> : vector<8x128xf32>
    %69 = tpu.matmul %67, %68, %cst_21 {dimension_numbers = #tpu.dot_dimension_numbers<[1], [0], [0], [1], [0, 0, 1, 1], [], []>} : vector<8x128xf32>, vector<128x128xf32>, vector<8x128xf32> -> vector<8x128xf32>
    %c3 = arith.constant 3 : index
    %c0_22 = arith.constant 0 : index
    %70 = vector.load %arg3[%c3, %c0_22] : memref<16x128xf32, #tpu.memory_space<vmem>>, vector<1x128xf32>
    %71 = vector.broadcast %70 : vector<1x128xf32> to vector<8x128xf32>
    %72 = arith.addf %69, %71 : vector<8x128xf32>
    %73 = arith.addf %1, %72 : vector<8x128xf32>
    %c8 = arith.constant 8 : index
    %c0_23 = arith.constant 0 : index
    %74 = vector.load %arg3[%c8, %c0_23] : memref<16x128xf32, #tpu.memory_space<vmem>>, vector<1x128xf32>
    %c9 = arith.constant 9 : index
    %c0_24 = arith.constant 0 : index
    %75 = vector.load %arg3[%c9, %c0_24] : memref<16x128xf32, #tpu.memory_space<vmem>>, vector<1x128xf32>
    %76 = vector.broadcast %6 : vector<1x128xf32> to vector<8x128xf32>
    %77 = arith.mulf %73, %76 : vector<8x128xf32>
    %cst_25 = arith.constant dense<0.000000e+00> : vector<8xf32>
    %78 = vector.multi_reduction <add>, %77, %cst_25 [1] : vector<8x128xf32> to vector<8xf32>
    %79 = vector.shape_cast %78 : vector<8xf32> to vector<8x1xf32>
    %cst_26 = arith.constant 3.200000e+01 : f32
    %80 = vector.broadcast %cst_26 : f32 to vector<8x1xf32>
    %81 = arith.divf %79, %80 : vector<8x1xf32>
    %82 = vector.broadcast %81 : vector<8x1xf32> to vector<8x128xf32>
    %83 = arith.subf %73, %82 : vector<8x128xf32>
    %84 = vector.broadcast %6 : vector<1x128xf32> to vector<8x128xf32>
    %85 = arith.mulf %83, %84 : vector<8x128xf32>
    %86 = arith.mulf %85, %85 : vector<8x128xf32>
    %cst_27 = arith.constant dense<0.000000e+00> : vector<8xf32>
    %87 = vector.multi_reduction <add>, %86, %cst_27 [1] : vector<8x128xf32> to vector<8xf32>
    %88 = vector.shape_cast %87 : vector<8xf32> to vector<8x1xf32>
    %cst_28 = arith.constant 3.100000e+01 : f32
    %89 = vector.broadcast %cst_28 : f32 to vector<8x1xf32>
    %90 = arith.divf %88, %89 : vector<8x1xf32>
    %91 = math.sqrt %90 : vector<8x1xf32>
    %92 = vector.broadcast %81 : vector<8x1xf32> to vector<8x128xf32>
    %93 = arith.subf %73, %92 : vector<8x128xf32>
    %94 = vector.broadcast %74 : vector<1x128xf32> to vector<8x128xf32>
    %95 = arith.mulf %94, %93 : vector<8x128xf32>
    %cst_29 = arith.constant 9.99999997E-7 : f32
    %96 = vector.broadcast %cst_29 : f32 to vector<8x1xf32>
    %97 = arith.addf %91, %96 : vector<8x1xf32>
    %98 = vector.broadcast %97 : vector<8x1xf32> to vector<8x128xf32>
    %99 = arith.divf %95, %98 : vector<8x128xf32>
    %100 = vector.broadcast %75 : vector<1x128xf32> to vector<8x128xf32>
    %101 = arith.addf %99, %100 : vector<8x128xf32>
    %c0_30 = arith.constant 0 : index
    %c512 = arith.constant 512 : index
    %102 = vector.load %arg2[%c0_30, %c512] : memref<128x768xf32, #tpu.memory_space<vmem>>, vector<128x128xf32>
    %cst_31 = arith.constant dense<0.000000e+00> : vector<8x128xf32>
    %103 = tpu.matmul %101, %102, %cst_31 {dimension_numbers = #tpu.dot_dimension_numbers<[1], [0], [0], [1], [0, 0, 1, 1], [], []>} : vector<8x128xf32>, vector<128x128xf32>, vector<8x128xf32> -> vector<8x128xf32>
    %c4 = arith.constant 4 : index
    %c0_32 = arith.constant 0 : index
    %104 = vector.load %arg3[%c4, %c0_32] : memref<16x128xf32, #tpu.memory_space<vmem>>, vector<1x128xf32>
    %105 = vector.broadcast %104 : vector<1x128xf32> to vector<8x128xf32>
    %106 = arith.addf %103, %105 : vector<8x128xf32>
    %cst_33 = arith.constant 0.000000e+00 : f32
    %107 = vector.broadcast %cst_33 : f32 to vector<8x128xf32>
    %108 = arith.maximumf %106, %107 : vector<8x128xf32>
    %c0_34 = arith.constant 0 : index
    %c640 = arith.constant 640 : index
    %109 = vector.load %arg2[%c0_34, %c640] : memref<128x768xf32, #tpu.memory_space<vmem>>, vector<128x128xf32>
    %cst_35 = arith.constant dense<0.000000e+00> : vector<8x128xf32>
    %110 = tpu.matmul %108, %109, %cst_35 {dimension_numbers = #tpu.dot_dimension_numbers<[1], [0], [0], [1], [0, 0, 1, 1], [], []>} : vector<8x128xf32>, vector<128x128xf32>, vector<8x128xf32> -> vector<8x128xf32>
    %c5 = arith.constant 5 : index
    %c0_36 = arith.constant 0 : index
    %111 = vector.load %arg3[%c5, %c0_36] : memref<16x128xf32, #tpu.memory_space<vmem>>, vector<1x128xf32>
    %112 = vector.broadcast %111 : vector<1x128xf32> to vector<8x128xf32>
    %113 = arith.addf %110, %112 : vector<8x128xf32>
    %114 = arith.addf %73, %113 : vector<8x128xf32>
    %c0_37 = arith.constant 0 : index
    %c0_38 = arith.constant 0 : index
    %c0_39 = arith.constant 0 : index
    %115 = vector.load %arg4[%c0_37, %c0_38, %c0_39] : memref<1x8x128xf32, #tpu.memory_space<vmem>>, vector<1x8x128xf32>
    %116 = vector.shape_cast %115 : vector<1x8x128xf32> to vector<8x128xf32>
    %117 = vector.shape_cast %114 : vector<8x128xf32> to vector<1x8x128xf32>
    tpu.vector_store %arg4[%c0_37, %c0_38, %c0_39], %117 {strides = array<i32>} : memref<1x8x128xf32, #tpu.memory_space<vmem>>, vector<1x8x128xf32>,
    return
  }
  func.func @transform_0(%arg0: i32) -> (i32, i32, i32) {
    %c0_i32 = arith.constant 0 : i32
    %c0_i32_0 = arith.constant 0 : i32
    %c0_i32_1 = arith.constant 0 : i32
    return %arg0, %c0_i32, %c0_i32_0 : i32, i32, i32
  }
  func.func @transform_1(%arg0: i32) -> (i32, i32) {
    %c0_i32 = arith.constant 0 : i32
    %c0_i32_0 = arith.constant 0 : i32
    %c0_i32_1 = arith.constant 0 : i32
    return %c0_i32, %c0_i32_0 : i32, i32
  }
  func.func @transform_2(%arg0: i32) -> (i32, i32) {
    %c0_i32 = arith.constant 0 : i32
    %c0_i32_0 = arith.constant 0 : i32
    %c0_i32_1 = arith.constant 0 : i32
    return %c0_i32, %c0_i32_0 : i32, i32
  }
  func.func @transform_3(%arg0: i32) -> (i32, i32, i32) {
    %c0_i32 = arith.constant 0 : i32
    %c0_i32_0 = arith.constant 0 : i32
    %c0_i32_1 = arith.constant 0 : i32
    return %arg0, %c0_i32, %c0_i32_0 : i32, i32, i32
  }
}

</mosaic_0001>

<llo_original>
// kernel: tpu_custom_call.1
$region0: #{tpu_custom_call.1}
  #allocation0 [shape = 'u32[]', space=smem, size = 0x4, offset = 0x4, fixed_abs, tag = 'smem constant byte address 0x4 - core index']
  #allocation1 [shape = 'u32[144,128]{1,0:T(1,128)}', space=vmem, size = 0x12000, scoped, tag = 'internal scratch']
  %s0 = inlined_call_operand.hbm [shape: f32[2,8,128], index: 0, kind: input, shape index: {}]
  %s1 = inlined_call_operand.hbm [shape: f32[128,768], index: 1, kind: input, shape index: {}]
  %s2 = inlined_call_operand.hbm [shape: f32[16,128], index: 2, kind: input, shape index: {}]
  %s3 = inlined_call_operand.hbm [shape: f32[2,8,128], index: 3, kind: output, shape index: {}]
  %s4 = sld [smem:[#allocation0]]
  $region57: #{tpu_custom_call.1} parent=0
    _
  %s6 = ssub.s32 1, %s4
  %s7 = scalar_select 0, %s6, %s4
  $region1: #{tpu_custom_call.1} parent=0
    #allocation2 [shape = 'u8[8192]{0}', space=vmem, size = 0x2000, scoped, tag = 'input window, operand 0']
    #allocation3 [shape = 's32[2]{0}', space=sflag, size = 0x8, scoped, tag = 'scoped memory for tpu_custom_call.1']
    #allocation4 [shape = 's32[2]{0}', space=sflag, size = 0x8, scoped, tag = 'scoped memory for tpu_custom_call.1']
    #allocation5 [shape = 'u8[393216]{0}', space=vmem, size = 0x60000, scoped, tag = 'input window, operand 1, single buffered']
    #allocation6 [shape = 's32[1]{0}', space=sflag, size = 0x4, scoped, tag = 'scoped memory for tpu_custom_call.1']
    #allocation7 [shape = 'u8[8192]{0}', space=vmem, size = 0x2000, scoped, tag = 'input window, operand 2, single buffered']
    #allocation8 [shape = 'u8[8192]{0}', space=vmem, size = 0x2000, scoped, tag = 'output window, operand 0']
    %8 = vsyncpa [#allocation3], 0
    %s9 = scalar_lea.sflag [#allocation3], 1
    %10 = vsyncpa %s9, 0
    %11 = vsyncpa [#allocation6], 0
    %12 = vsyncpa [#allocation4], 0
    %s13 = scalar_lea.sflag [#allocation4], 1
    %14 = vsyncpa %s13, 0
    loop: start=0, step=1, limit=4
    $region2: #{tpu_custom_call.1} parent=1 // loop_pre_header
      _
    $region3: #{tpu_custom_call.1} parent=1 // loop_header
      %s16 = sphi 0, %s20
      %p17 = scmp.ge.s32.totalorder %s16, 4
      %s26 = sphi 0, %s28
      %s29 = sphi 0, %s26
      %s30 = sphi 0, %s29
      %s46 = sphi 0, %s30
      %s50 = sphi 0, %s50
      %s52 = sphi 0, %s50
      %s53 = sphi 0, %s52
      %s67 = sphi 0, %s53
      %s71 = sphi 0, %s71
      %s73 = sphi 0, %s71
      %s74 = sphi 0, %s73
      %s88 = sphi 0, %s74
      %s94 = sphi 0, %s96
      %s97 = sphi 0, %s94
      %s98 = sphi 0, %s97
      %s114 = sphi 0, %s98
    $region4: #{tpu_custom_call.1} parent=1 // loop_header_branch
      %19 = sbr.rel (%p17) target = $region8
    $region5: #{tpu_custom_call.1} parent=1 // loop_body
      %s21 = ssub.s32 %s16, 1
      %s22 = ssub.s32 %s16, 2
      %s23 = sadd.s32 %s16, 1
      %s24 = ssub.s32 %s16, %s23
      %p25 = scmp.eq.s32.totalorder %s24, 0
      %s27 = sadd.s32 %s26, 1
      %s28 = scalar_select %p25, %s26, %s27
      %p31 = pneg %p25
      %p32 = scmp.eq.s32.totalorder %s16, 1
      %p33 = por %p31, %p32
      %p34 = scmp.ne.s32.totalorder %s26, %s29
      %p35 = scmp.eq.s32.totalorder %s16, 0
      %p36 = por %p34, %p35
      %p37 = scmp.ne.s32.totalorder %s26, %s29
      %p38 = scmp.eq.s32.totalorder %s21, 1
      %p39 = por %p37, %p38
      %p40 = scmp.ne.s32.totalorder %s29, %s30
      %p41 = scmp.eq.s32.totalorder %s21, 0
      %p42 = por %p40, %p41
      %p43 = scmp.ne.s32.totalorder %s29, %s30
      %p44 = scmp.eq.s32.totalorder %s22, 1
      %p45 = por %p43, %p44
      %p47 = scmp.ne.s32.totalorder %s30, %s46
      %p48 = scmp.eq.s32.totalorder %s22, 0
      %p49 = por %p47, %p48
      %s51 = sadd.s32 %s50, 1
      %p54 = scmp.eq.s32.totalorder %s16, 1
      %p55 = scmp.ne.s32.totalorder %s50, %s52
      %p56 = scmp.eq.s32.totalorder %s16, 0
      %p57 = por %p55, %p56
      %p58 = scmp.ne.s32.totalorder %s50, %s52
      %p59 = scmp.eq.s32.totalorder %s21, 1
      %p60 = por %p58, %p59
      %p61 = scmp.ne.s32.totalorder %s52, %s53
      %p62 = scmp.eq.s32.totalorder %s21, 0
      %p63 = por %p61, %p62
      %p64 = scmp.ne.s32.totalorder %s52, %s53
      %p65 = scmp.eq.s32.totalorder %s22, 1
      %p66 = por %p64, %p65
      %p68 = scmp.ne.s32.totalorder %s53, %s67
      %p69 = scmp.eq.s32.totalorder %s22, 0
      %p70 = por %p68, %p69
      %s72 = sadd.s32 %s71, 1
      %p75 = scmp.eq.s32.totalorder %s16, 1
      %p76 = scmp.ne.s32.totalorder %s71, %s73
      %p77 = scmp.eq.s32.totalorder %s16, 0
      %p78 = por %p76, %p77
      %p79 = scmp.ne.s32.totalorder %s71, %s73
      %p80 = scmp.eq.s32.totalorder %s21, 1
      %p81 = por %p79, %p80
      %p82 = scmp.ne.s32.totalorder %s73, %s74
      %p83 = scmp.eq.s32.totalorder %s21, 0
      %p84 = por %p82, %p83
      %p85 = scmp.ne.s32.totalorder %s73, %s74
      %p86 = scmp.eq.s32.totalorder %s22, 1
      %p87 = por %p85, %p86
      %p89 = scmp.ne.s32.totalorder %s74, %s88
      %p90 = scmp.eq.s32.totalorder %s22, 0
      %p91 = por %p89, %p90
      %s92 = ssub.s32 %s16, %s23
      %p93 = scmp.eq.s32.totalorder %s92, 0
      %s95 = sadd.s32 %s94, 1
      %s96 = scalar_select %p93, %s94, %s95
      %p99 = pneg %p93
      %p100 = scmp.eq.s32.totalorder %s16, 1
      %p101 = por %p99, %p100
      %p102 = scmp.ne.s32.totalorder %s94, %s97
      %p103 = scmp.eq.s32.totalorder %s16, 0
      %p104 = por %p102, %p103
      %p105 = scmp.ne.s32.totalorder %s94, %s97
      %p106 = scmp.eq.s32.totalorder %s21, 1
      %p107 = por %p105, %p106
      %p108 = scmp.ne.s32.totalorder %s97, %s98
      %p109 = scmp.eq.s32.totalorder %s21, 0
      %p110 = por %p108, %p109
      %p111 = scmp.ne.s32.totalorder %s97, %s98
      %p112 = scmp.eq.s32.totalorder %s22, 1
      %p113 = por %p111, %p112
      %p115 = scmp.ne.s32.totalorder %s98, %s114
      %p116 = scmp.eq.s32.totalorder %s22, 0
      %p117 = por %p115, %p116
      %p118 = scmp.le.s32.totalorder 1, %s16
      %p119 = scmp.lt.s32.totalorder %s16, 3
      %p120 = pnand %p118, %p119
      %p121 = pneg %p120
      // Predicated region
      $region9: #{tpu_custom_call.1} parent=5 // pred_check
        _
      $region10: #{tpu_custom_call.1} parent=5 // pred_check_branch
        %123 = sbr.rel (%p120) target = $region12
      $region11: #{tpu_custom_call.1} parent=5 // pred_region
        %s124 = ssub.s32 %s16, 1
        // Predicated region
        $region13: #{tpu_custom_call.1} parent=11 // pred_check
          %p125 = pneg %p63
        $region14: #{tpu_custom_call.1} parent=11 // pred_check_branch
          %127 = sbr.rel (%p125) target = $region16
        $region15: #{tpu_custom_call.1} parent=11 // pred_region
          %s129 = ssub.s32 12288, 12288
          %130 = vsyncadd [#allocation6], %s129
          %s131 = sshll.u32 [#allocation5], 4
          %s132 = int_to_ptr.vmem [resolvable:$true] %s131
          %137 = dma.hbm_to_vmem [thread:$0]  %s1, 12288, %s132, [#allocation6], 768, 768, 48
        $region16: #{tpu_custom_call.1} parent=11 // pred_fallthru
          _
        // Predicated region
        $region17: #{tpu_custom_call.1} parent=11 // pred_check
          %p138 = pneg %p84
        $region18: #{tpu_custom_call.1} parent=11 // pred_check_branch
          %140 = sbr.rel (%p138) target = $region20
        $region19: #{tpu_custom_call.1} parent=11 // pred_region
          %s142 = ssub.s32 256, 256
          %143 = vsyncadd [#allocation6], %s142
          %s144 = sshll.u32 [#allocation7], 4
          %s145 = int_to_ptr.vmem [resolvable:$true] %s144
          %150 = dma.hbm_to_vmem [thread:$0]  %s2, 256, %s145, [#allocation6], 128, 128, 8
        $region20: #{tpu_custom_call.1} parent=11 // pred_fallthru
          _
      $region12: #{tpu_custom_call.1} parent=5 // pred_fallthru
        _
      %p151 = scmp.lt.s32.totalorder %s16, 2
      // Predicated region
      $region21: #{tpu_custom_call.1} parent=5 // pred_check
        %p152 = pneg %p151
      $region22: #{tpu_custom_call.1} parent=5 // pred_check_branch
        %154 = sbr.rel (%p152) target = $region24
      $region23: #{tpu_custom_call.1} parent=5 // pred_region
        // Predicated region
        $region25: #{tpu_custom_call.1} parent=23 // pred_check
          %p155 = pneg %p36
        $region26: #{tpu_custom_call.1} parent=23 // pred_check_branch
          %157 = sbr.rel (%p155) target = $region28
        $region27: #{tpu_custom_call.1} parent=23 // pred_region
          %s158 = sand.u32 %s26, 1
          %s159 = scalar_lea.sflag [#allocation3], %s158
          %s160 = sand.u32 %s26, 1
          %s161 = smul.addr %s160, 8
          %s162 = scalar_lea.vmem [#allocation2], %s161
          %s164 = ssub.s32 128, 128
          %165 = vsyncadd %s159, %s164
          %s166 = smul.addr %s16, 128
          %s167 = scalar_lea.hbm %s0, %s166
          %s169 = sshll.u32 %s162, 4
          %s170 = int_to_ptr.vmem [resolvable:$true] %s169
          %172 = dma.hbm_to_vmem [thread:$0]  %s167, 128, %s170, %s159
        $region28: #{tpu_custom_call.1} parent=23 // pred_fallthru
          _
      $region24: #{tpu_custom_call.1} parent=5 // pred_fallthru
        _
      %p173 = scmp.le.s32.totalorder 1, %s16
      %p174 = scmp.lt.s32.totalorder %s16, 3
      %p175 = pnand %p173, %p174
      %p176 = pneg %p175
      // Predicated region
      $region29: #{tpu_custom_call.1} parent=5 // pred_check
        _
      $region30: #{tpu_custom_call.1} parent=5 // pred_check_branch
        %178 = sbr.rel (%p175) target = $region32
      $region31: #{tpu_custom_call.1} parent=5 // pred_region
        %s179 = ssub.s32 %s16, 1
        %s180 = sand.u32 %s29, 1
        %s181 = scalar_lea.sflag [#allocation3], %s180
        %s182 = sand.u32 %s29, 1
        %s183 = smul.addr %s182, 8
        %s184 = scalar_lea.vmem [#allocation2], %s183
        // Predicated region
        $region33: #{tpu_custom_call.1} parent=31 // pred_check
          %p185 = pneg %p42
        $region34: #{tpu_custom_call.1} parent=31 // pred_check_branch
          %187 = sbr.rel (%p185) target = $region36
        $region35: #{tpu_custom_call.1} parent=31 // pred_region
          %188 = dma.done %s181, 128
        $region36: #{tpu_custom_call.1} parent=31 // pred_fallthru
          _
        // Predicated region
        $region37: #{tpu_custom_call.1} parent=31 // pred_check
          %p189 = pneg %p63
        $region38: #{tpu_custom_call.1} parent=31 // pred_check_branch
          %191 = sbr.rel (%p189) target = $region40
        $region39: #{tpu_custom_call.1} parent=31 // pred_region
          %192 = dma.done [#allocation6], 12288
        $region40: #{tpu_custom_call.1} parent=31 // pred_fallthru
          _
        // Predicated region
        $region41: #{tpu_custom_call.1} parent=31 // pred_check
          %p193 = pneg %p84
        $region42: #{tpu_custom_call.1} parent=31 // pred_check_branch
          %195 = sbr.rel (%p193) target = $region44
        $region43: #{tpu_custom_call.1} parent=31 // pred_region
          %196 = dma.done [#allocation6], 256
        $region44: #{tpu_custom_call.1} parent=31 // pred_fallthru
          _
        %s197 = sand.u32 %s29, 1
        %s198 = scalar_lea.sflag [#allocation3], %s197
        %s199 = sand.u32 %s29, 1
        %s200 = smul.addr %s199, 8
        %s201 = scalar_lea.vmem [#allocation2], %s200
        %p202 = pneg %p42
        %p203 = pneg %p39
        %p204 = pneg %p63
        %p205 = pneg %p60
        %p206 = pneg %p84
        %p207 = pneg %p81
        %p208 = pneg %p110
        %p209 = pneg %p107
        %s210 = sand.u32 %s97, 1
        %s211 = scalar_lea.sflag [#allocation4], %s210
        %s212 = sand.u32 %s97, 1
        %s213 = smul.addr %s212, 8
        %s214 = scalar_lea.vmem [#allocation8], %s213
        %v215 = vld [vmem:[%s184] sm:$0xff]
        %v216 = vlaneseq
        %v217 = vand.u32 %v216, 127
        %vm218 = vcmp.lt.s32.totalorder %v217, 32
        %v219 = vsel %vm218, 1, 0
        %v220 = vcvt.s32.f32 %v219
        %v221 = vld [vmem:[#allocation7 + $0x6] sm:$0x1]
        %v222 = vld [vmem:[#allocation7 + $0x7] sm:$0x1]
        %v223 = vmul.f32 %v215, %v220
        %224 = vadd.xlane.f32.xlu0 %v223
        %v225 = vpop.xlane.xlu0 %224
        %v226 = vrcp.pop 32.0
        %v227 = vmul.f32 %v225, %v226
        %v228 = vsub.f32 %v215, %v227
        %v229 = vmul.f32 %v228, %v220
        %v230 = vmul.f32 %v229, %v229
        %231 = vadd.xlane.f32.xlu0 %v230
        %v232 = vpop.xlane.xlu0 %231
        %v233 = vrcp.pop 31.0
        %v234 = vmul.f32 %v232, %v233
        %v235 = vrsqrt.pop %v234
        %v236 = vmul.f32 %v234, %v235
        %vm237 = vcmp.eq.f32.partialorder %v234, inf
        %v238 = vsel %vm237, %v234, %v236
        %vm239 = vcmp.eq.f32.partialorder %v234, 0.0
        %v240 = vand.u32 %v234, 2147483648
        %v241 = vsel %vm239, %v240, %v238
        %v242 = vlaneseq
        %v243 = vshrl.u32 %v242, 7
        %v244 = vsub.s32 0, %v243
        %v245 = vrot.slane %v221, %v244
        %v246 = vmul.f32 %v245, %v228
        %v247 = vadd.f32 %v241, 1e-06
        %v248 = vrcp.pop %v247
        %v249 = vmul.f32 %v246, %v248
        %v250 = vlaneseq
        %v251 = vshrl.u32 %v250, 7
        %v252 = vsub.s32 0, %v251
        %v253 = vrot.slane %v222, %v252
        %v254 = vadd.f32 %v249, %v253
        %v255 = vld [vmem:[#allocation5] sm:$0xff]
        %v256 = vld [vmem:[#allocation5 + $0x8] sm:$0xff]
        %v257 = vld [vmem:[#allocation5 + $0x10] sm:$0xff]
        %v258 = vld [vmem:[#allocation5 + $0x30] sm:$0xff]
        %v259 = vld [vmem:[#allocation5 + $0x38] sm:$0xff]
        %v260 = vld [vmem:[#allocation5 + $0x40] sm:$0xff]
        %v261 = vld [vmem:[#allocation5 + $0x60] sm:$0xff]
        %v262 = vld [vmem:[#allocation5 + $0x68] sm:$0xff]
        %v263 = vld [vmem:[#allocation5 + $0x70] sm:$0xff]
        %v264 = vld [vmem:[#allocation5 + $0x90] sm:$0xff]
        %v265 = vld [vmem:[#allocation5 + $0x98] sm:$0xff]
        %v266 = vld [vmem:[#allocation5 + $0xa0] sm:$0xff]
        %v267 = vld [vmem:[#allocation5 + $0xc0] sm:$0xff]
        %v268 = vld [vmem:[#allocation5 + $0xc8] sm:$0xff]
        %v269 = vld [vmem:[#allocation5 + $0xd0] sm:$0xff]
        %v270 = vld [vmem:[#allocation5 + $0xf0] sm:$0xff]
        %v271 = vld [vmem:[#allocation5 + $0xf8] sm:$0xff]
        %v272 = vld [vmem:[#allocation5 + $0x100] sm:$0xff]
        %v273 = vld [vmem:[#allocation5 + $0x120] sm:$0xff]
        %v274 = vld [vmem:[#allocation5 + $0x128] sm:$0xff]
        %v275 = vld [vmem:[#allocation5 + $0x130] sm:$0xff]
        %v276 = vld [vmem:[#allocation5 + $0x150] sm:$0xff]
        %v277 = vld [vmem:[#allocation5 + $0x158] sm:$0xff]
        %v278 = vld [vmem:[#allocation5 + $0x160] sm:$0xff]
        %v279 = vld [vmem:[#allocation5 + $0x180] sm:$0xff]
        %v280 = vld [vmem:[#allocation5 + $0x188] sm:$0xff]
        %v281 = vld [vmem:[#allocation5 + $0x190] sm:$0xff]
        %v282 = vld [vmem:[#allocation5 + $0x1b0] sm:$0xff]
        %v283 = vld [vmem:[#allocation5 + $0x1b8] sm:$0xff]
        %v284 = vld [vmem:[#allocation5 + $0x1c0] sm:$0xff]
        %v285 = vld [vmem:[#allocation5 + $0x1e0] sm:$0xff]
        %v286 = vld [vmem:[#allocation5 + $0x1e8] sm:$0xff]
        %v287 = vld [vmem:[#allocation5 + $0x1f0] sm:$0xff]
        %v288 = vld [vmem:[#allocation5 + $0x210] sm:$0xff]
        %v289 = vld [vmem:[#allocation5 + $0x218] sm:$0xff]
        %v290 = vld [vmem:[#allocation5 + $0x220] sm:$0xff]
        %v291 = vld [vmem:[#allocation5 + $0x240] sm:$0xff]
        %v292 = vld [vmem:[#allocation5 + $0x248] sm:$0xff]
        %v293 = vld [vmem:[#allocation5 + $0x250] sm:$0xff]
        %v294 = vld [vmem:[#allocation5 + $0x270] sm:$0xff]
        %v295 = vld [vmem:[#allocation5 + $0x278] sm:$0xff]
        %v296 = vld [vmem:[#allocation5 + $0x280] sm:$0xff]
        %v297 = vld [vmem:[#allocation5 + $0x2a0] sm:$0xff]
        %v298 = vld [vmem:[#allocation5 + $0x2a8] sm:$0xff]
        %v299 = vld [vmem:[#allocation5 + $0x2b0] sm:$0xff]
        %v300 = vld [vmem:[#allocation5 + $0x2d0] sm:$0xff]
        %v301 = vld [vmem:[#allocation5 + $0x2d8] sm:$0xff]
        %v302 = vld [vmem:[#allocation5 + $0x2e0] sm:$0xff]
        %303 = vmatprep.subr.mxu0 %v256
        %304 = vmatpush1.msra.mxu0 %v255
        %305 = vmatprep.subr.mxu0 %v259
        %306 = vmatpush1.msra.mxu0 %v258
        %307 = vmatprep.subr.mxu0 %v262
        %308 = vmatpush1.msra.mxu0 %v261
        %309 = vmatprep.subr.mxu0 %v265
        %310 = vmatpush1.msra.mxu0 %v264
        %311 = vmatprep.subr.mxu0 %v268
        %312 = vmatpush1.msra.mxu0 %v267
        %313 = vmatprep.subr.mxu0 %v271
        %314 = vmatpush1.msra.mxu0 %v270
        %315 = vmatprep.subr.mxu0 %v274
        %316 = vmatpush1.msra.mxu0 %v273
        %317 = vmatprep.subr.mxu0 %v277
        %318 = vmatpush1.msra.mxu0 %v276
        %319 = vmatprep.subr.mxu0 %v280
        %320 = vmatpush1.msra.mxu0 %v279
        %321 = vmatprep.subr.mxu0 %v283
        %322 = vmatpush1.msra.mxu0 %v282
        %323 = vmatprep.subr.mxu0 %v286
        %324 = vmatpush1.msra.mxu0 %v285
        %325 = vmatprep.subr.mxu0 %v289
        %326 = vmatpush1.msra.mxu0 %v288
        %327 = vmatprep.subr.mxu0 %v292
        %328 = vmatpush1.msra.mxu0 %v291
        %329 = vmatprep.subr.mxu0 %v295
        %330 = vmatpush1.msra.mxu0 %v294
        %331 = vmatprep.subr.mxu0 %v298
        %332 = vmatpush1.msra.mxu0 %v297
        %333 = vmatprep.subr.mxu0 %v301
        %334 = vmatpush1.msra.mxu0 %v300
        %335 = vmatprep.subr.mxu0 0.0
        %336 = vmatpush1.msra.mxu0 0.0
        %337 = vmatprep.subr.mxu0 0.0
        %338 = vmatpush1.msra.mxu0 0.0
        %339 = vmatprep.subr.mxu0 0.0
        %340 = vmatpush1.msra.mxu0 0.0
        %341 = vmatprep.subr.mxu0 0.0
        %342 = vmatpush1.msra.mxu0 0.0
        %343 = vmatprep.subr.mxu0 0.0
        %344 = vmatpush1.msra.mxu0 0.0
        %345 = vmatprep.subr.mxu0 0.0
        %346 = vmatpush1.msra.mxu0 0.0
        %347 = vmatprep.subr.mxu0 0.0
        %348 = vmatpush1.msra.mxu0 0.0
        %349 = vmatprep.subr.mxu0 0.0
        %350 = vmatpush1.msra.mxu0 0.0
        %351 = vmatprep.subr.mxu0 0.0
        %352 = vmatpush1.msra.mxu0 0.0
        %353 = vmatprep.subr.mxu0 0.0
        %354 = vmatpush1.msra.mxu0 0.0
        %355 = vmatprep.subr.mxu0 0.0
        %356 = vmatpush1.msra.mxu0 0.0
        %357 = vmatprep.subr.mxu0 0.0
        %358 = vmatpush1.msra.mxu0 0.0
        %359 = vmatprep.subr.mxu0 0.0
        %360 = vmatpush1.msra.mxu0 0.0
        %361 = vmatprep.subr.mxu0 0.0
        %362 = vmatpush1.msra.mxu0 0.0
        %363 = vmatprep.subr.mxu0 0.0
        %364 = vmatpush1.msra.mxu0 0.0
        %365 = vmatprep.subr.mxu0 0.0
        %366 = vmatpush1.msra.mxu0 0.0
        %367 = vmatprep.mubr.f32.mxu0 0.0
        %368 = vmatmul.mubr.f32.gmra.mrb[0].mxu0 %v254
        %v369 = vpop.f32.mrb[0].mxu0
        %v370 = vadd.f32 0.0, %v369
        %v371 = vpop.f32.mrb[0].mxu0
        %v372 = vadd.f32 0.0, %v371
        %373 = vdwg.mxu0
        %374 = vmatprep.subr.mxu0 0.0
        %375 = vmatpush1.msra.mxu0 %v257
        %376 = vmatprep.subr.mxu0 0.0
        %377 = vmatpush1.msra.mxu0 %v260
        %378 = vmatprep.subr.mxu0 0.0
        %379 = vmatpush1.msra.mxu0 %v263
        %380 = vmatprep.subr.mxu0 0.0
        %381 = vmatpush1.msra.mxu0 %v266
        %382 = vmatprep.subr.mxu0 0.0
        %383 = vmatpush1.msra.mxu0 %v269
        %384 = vmatprep.subr.mxu0 0.0
        %385 = vmatpush1.msra.mxu0 %v272
        %386 = vmatprep.subr.mxu0 0.0
        %387 = vmatpush1.msra.mxu0 %v275
        %388 = vmatprep.subr.mxu0 0.0
        %389 = vmatpush1.msra.mxu0 %v278
        %390 = vmatprep.subr.mxu0 0.0
        %391 = vmatpush1.msra.mxu0 %v281
        %392 = vmatprep.subr.mxu0 0.0
        %393 = vmatpush1.msra.mxu0 %v284
        %394 = vmatprep.subr.mxu0 0.0
        %395 = vmatpush1.msra.mxu0 %v287
        %396 = vmatprep.subr.mxu0 0.0
        %397 = vmatpush1.msra.mxu0 %v290
        %398 = vmatprep.subr.mxu0 0.0
        %399 = vmatpush1.msra.mxu0 %v293
        %400 = vmatprep.subr.mxu0 0.0
        %401 = vmatpush1.msra.mxu0 %v296
        %402 = vmatprep.subr.mxu0 0.0
        %403 = vmatpush1.msra.mxu0 %v299
        %404 = vmatprep.subr.mxu0 0.0
        %405 = vmatpush1.msra.mxu0 %v302
        %406 = vmatprep.subr.mxu0 0.0
        %407 = vmatpush1.msra.mxu0 0.0
        %408 = vmatprep.subr.mxu0 0.0
        %409 = vmatpush1.msra.mxu0 0.0
        %410 = vmatprep.subr.mxu0 0.0
        %411 = vmatpush1.msra.mxu0 0.0
        %412 = vmatprep.subr.mxu0 0.0
        %413 = vmatpush1.msra.mxu0 0.0
        %414 = vmatprep.subr.mxu0 0.0
        %415 = vmatpush1.msra.mxu0 0.0
        %416 = vmatprep.subr.mxu0 0.0
        %417 = vmatpush1.msra.mxu0 0.0
        %418 = vmatprep.subr.mxu0 0.0
        %419 = vmatpush1.msra.mxu0 0.0
        %420 = vmatprep.subr.mxu0 0.0
        %421 = vmatpush1.msra.mxu0 0.0
        %422 = vmatprep.subr.mxu0 0.0
        %423 = vmatpush1.msra.mxu0 0.0
        %424 = vmatprep.subr.mxu0 0.0
        %425 = vmatpush1.msra.mxu0 0.0
        %426 = vmatprep.subr.mxu0 0.0
        %427 = vmatpush1.msra.mxu0 0.0
        %428 = vmatprep.subr.mxu0 0.0
        %429 = vmatpush1.msra.mxu0 0.0
        %430 = vmatprep.subr.mxu0 0.0
        %431 = vmatpush1.msra.mxu0 0.0
        %432 = vmatprep.subr.mxu0 0.0
        %433 = vmatpush1.msra.mxu0 0.0
        %434 = vmatprep.subr.mxu0 0.0
        %435 = vmatpush1.msra.mxu0 0.0
        %436 = vmatprep.subr.mxu0 0.0
        %437 = vmatpush1.msra.mxu0 0.0
        %438 = vmatprep.mubr.f32.mxu0 0.0
        %439 = vmatmul.mubr.f32.gmra.mrb[0].mxu0 %v254
        %v440 = vpop.f32.mrb[0].mxu0
        %v441 = vadd.f32 0.0, %v440
        %v442 = vpop.f32.mrb[0].mxu0
        %443 = vdwg.mxu0
        %v444 = vld [vmem:[#allocation7] sm:$0x1]
        %v445 = vlaneseq
        %v446 = vshrl.u32 %v445, 7
        %v447 = vsub.s32 0, %v446
        %v448 = vrot.slane %v444, %v447
        %v449 = vadd.f32 %v370, %v448
        %451 = vrot.lane.b32.xlu0 %v449, 96
        %v452 = vpop.permute.xlu0 %451
        %453 = vrot.lane.b32.xlu0 %v449, 64
        %v454 = vpop.permute.xlu0 %453
        %455 = vrot.lane.b32.xlu0 %v449, 32
        %v456 = vpop.permute.xlu0 %455
        %v457 = vld [vmem:[#allocation7 + $0x1] sm:$0x1]
        %v458 = vlaneseq
        %v459 = vshrl.u32 %v458, 7
        %v460 = vsub.s32 0, %v459
        %v461 = vrot.slane %v457, %v460
        %v462 = vadd.f32 %v372, %v461
        %464 = vrot.lane.b32.xlu0 %v462, 96
        %v465 = vpop.permute.xlu0 %464
        %467 = vrot.lane.b32.xlu0 %v462, 64
        %v468 = vpop.permute.xlu0 %467
        %470 = vrot.lane.b32.xlu0 %v462, 32
        %v471 = vpop.permute.xlu0 %470
        %v473 = vld [vmem:[#allocation7 + $0x2] sm:$0x1]
        %v474 = vlaneseq
        %v475 = vshrl.u32 %v474, 7
        %v476 = vsub.s32 0, %v475
        %v477 = vrot.slane %v473, %v476
        %v478 = vadd.f32 %v441, %v477
        %480 = vrot.lane.b32.xlu0 %v478, 96
        %v481 = vpop.permute.xlu0 %480
        %483 = vrot.lane.b32.xlu0 %v478, 64
        %v484 = vpop.permute.xlu0 %483
        %486 = vrot.lane.b32.xlu0 %v478, 32
        %v487 = vpop.permute.xlu0 %486
        %489 = vxpose.xlu0.b32.start [1/16] %v462, 128
        %490 = vxpose.xlu0.b32.cont [2/16] 0.0, 128
        %491 = vxpose.xlu0.b32.cont [3/16] 0.0, 128
        %492 = vxpose.xlu0.b32.cont [4/16] 0.0, 128
        %493 = vxpose.xlu0.b32.cont [5/16] 0.0, 128
        %494 = vxpose.xlu0.b32.cont [6/16] 0.0, 128
        %495 = vxpose.xlu0.b32.cont [7/16] 0.0, 128
        %496 = vxpose.xlu0.b32.cont [8/16] 0.0, 128
        %497 = vxpose.xlu0.b32.cont [9/16] 0.0, 128
        %498 = vxpose.xlu0.b32.cont [10/16] 0.0, 128
        %499 = vxpose.xlu0.b32.cont [11/16] 0.0, 128
        %500 = vxpose.xlu0.b32.cont [12/16] 0.0, 128
        %501 = vxpose.xlu0.b32.cont [13/16] 0.0, 128
        %502 = vxpose.xlu0.b32.cont [14/16] 0.0, 128
        %503 = vxpose.xlu0.b32.cont [15/16] 0.0, 128
        %504 = vxpose.xlu0.b32.end [16/16] 0.0, 128
        %v505 = vpop.trf.xlu0
        %v506 = vpop.trf.xlu0
        %v507 = vpop.trf.xlu0
        %v508 = vpop.trf.xlu0
        %v509 = vpop.trf.xlu0
        %v510 = vpop.trf.xlu0
        %v511 = vpop.trf.xlu0
        %v512 = vpop.trf.xlu0
        %v513 = vpop.trf.xlu0
        %v514 = vpop.trf.xlu0
        %v515 = vpop.trf.xlu0
        %v516 = vpop.trf.xlu0
        %v517 = vpop.trf.xlu0
        %v518 = vpop.trf.xlu0
        %v519 = vpop.trf.xlu0
        %v520 = vpop.trf.xlu0
        %521 = vxpose.xlu0.b32.start [1/16] %v465, 128
        %522 = vxpose.xlu0.b32.cont [2/16] 0.0, 128
        %523 = vxpose.xlu0.b32.cont [3/16] 0.0, 128
        %524 = vxpose.xlu0.b32.cont [4/16] 0.0, 128
        %525 = vxpose.xlu0.b32.cont [5/16] 0.0, 128
        %526 = vxpose.xlu0.b32.cont [6/16] 0.0, 128
        %527 = vxpose.xlu0.b32.cont [7/16] 0.0, 128
        %528 = vxpose.xlu0.b32.cont [8/16] 0.0, 128
        %529 = vxpose.xlu0.b32.cont [9/16] 0.0, 128
        %530 = vxpose.xlu0.b32.cont [10/16] 0.0, 128
        %531 = vxpose.xlu0.b32.cont [11/16] 0.0, 128
        %532 = vxpose.xlu0.b32.cont [12/16] 0.0, 128
        %533 = vxpose.xlu0.b32.cont [13/16] 0.0, 128
        %534 = vxpose.xlu0.b32.cont [14/16] 0.0, 128
        %535 = vxpose.xlu0.b32.cont [15/16] 0.0, 128
        %536 = vxpose.xlu0.b32.end [16/16] 0.0, 128
        %v537 = vpop.trf.xlu0
        %v538 = vpop.trf.xlu0
        %v539 = vpop.trf.xlu0
        %v540 = vpop.trf.xlu0
        %v541 = vpop.trf.xlu0
        %v542 = vpop.trf.xlu0
        %v543 = vpop.trf.xlu0
        %v544 = vpop.trf.xlu0
        %v545 = vpop.trf.xlu0
        %v546 = vpop.trf.xlu0
        %v547 = vpop.trf.xlu0
        %v548 = vpop.trf.xlu0
        %v549 = vpop.trf.xlu0
        %v550 = vpop.trf.xlu0
        %v551 = vpop.trf.xlu0
        %v552 = vpop.trf.xlu0
        %553 = vxpose.xlu0.b32.start [1/16] %v468, 128
        %554 = vxpose.xlu0.b32.cont [2/16] 0.0, 128
        %555 = vxpose.xlu0.b32.cont [3/16] 0.0, 128
        %556 = vxpose.xlu0.b32.cont [4/16] 0.0, 128
        %557 = vxpose.xlu0.b32.cont [5/16] 0.0, 128
        %558 = vxpose.xlu0.b32.cont [6/16] 0.0, 128
        %559 = vxpose.xlu0.b32.cont [7/16] 0.0, 128
        %560 = vxpose.xlu0.b32.cont [8/16] 0.0, 128
        %561 = vxpose.xlu0.b32.cont [9/16] 0.0, 128
        %562 = vxpose.xlu0.b32.cont [10/16] 0.0, 128
        %563 = vxpose.xlu0.b32.cont [11/16] 0.0, 128
        %564 = vxpose.xlu0.b32.cont [12/16] 0.0, 128
        %565 = vxpose.xlu0.b32.cont [13/16] 0.0, 128
        %566 = vxpose.xlu0.b32.cont [14/16] 0.0, 128
        %567 = vxpose.xlu0.b32.cont [15/16] 0.0, 128
        %568 = vxpose.xlu0.b32.end [16/16] 0.0, 128
        %v569 = vpop.trf.xlu0
        %v570 = vpop.trf.xlu0
        %v571 = vpop.trf.xlu0
        %v572 = vpop.trf.xlu0
        %v573 = vpop.trf.xlu0
        %v574 = vpop.trf.xlu0
        %v575 = vpop.trf.xlu0
        %v576 = vpop.trf.xlu0
        %v577 = vpop.trf.xlu0
        %v578 = vpop.trf.xlu0
        %v579 = vpop.trf.xlu0
        %v580 = vpop.trf.xlu0
        %v581 = vpop.trf.xlu0
        %v582 = vpop.trf.xlu0
        %v583 = vpop.trf.xlu0
        %v584 = vpop.trf.xlu0
        %585 = vxpose.xlu0.b32.start [1/16] %v471, 128
        %586 = vxpose.xlu0.b32.cont [2/16] 0.0, 128
        %587 = vxpose.xlu0.b32.cont [3/16] 0.0, 128
        %588 = vxpose.xlu0.b32.cont [4/16] 0.0, 128
        %589 = vxpose.xlu0.b32.cont [5/16] 0.0, 128
        %590 = vxpose.xlu0.b32.cont [6/16] 0.0, 128
        %591 = vxpose.xlu0.b32.cont [7/16] 0.0, 128
        %592 = vxpose.xlu0.b32.cont [8/16] 0.0, 128
        %593 = vxpose.xlu0.b32.cont [9/16] 0.0, 128
        %594 = vxpose.xlu0.b32.cont [10/16] 0.0, 128
        %595 = vxpose.xlu0.b32.cont [11/16] 0.0, 128
        %596 = vxpose.xlu0.b32.cont [12/16] 0.0, 128
        %597 = vxpose.xlu0.b32.cont [13/16] 0.0, 128
        %598 = vxpose.xlu0.b32.cont [14/16] 0.0, 128
        %599 = vxpose.xlu0.b32.cont [15/16] 0.0, 128
        %600 = vxpose.xlu0.b32.end [16/16] 0.0, 128
        %v601 = vpop.trf.xlu0
        %v602 = vpop.trf.xlu0
        %v603 = vpop.trf.xlu0
        %v604 = vpop.trf.xlu0
        %v605 = vpop.trf.xlu0
        %v606 = vpop.trf.xlu0
        %v607 = vpop.trf.xlu0
        %v608 = vpop.trf.xlu0
        %v609 = vpop.trf.xlu0
        %v610 = vpop.trf.xlu0
        %v611 = vpop.trf.xlu0
        %v612 = vpop.trf.xlu0
        %v613 = vpop.trf.xlu0
        %v614 = vpop.trf.xlu0
        %v615 = vpop.trf.xlu0
        %v616 = vpop.trf.xlu0
        %vm617 = vcmask 261120
        %v618 = vsel %vm617, %v449, 0
        %620 = vmatprep.subr.mxu0 0.0
        %621 = vmatpush1.msra.mxu0 %v505
        %622 = vmatprep.subr.mxu0 0.0
        %623 = vmatpush1.msra.mxu0 %v506
        %624 = vmatprep.subr.mxu0 0.0
        %625 = vmatpush1.msra.mxu0 %v507
        %626 = vmatprep.subr.mxu0 0.0
        %627 = vmatpush1.msra.mxu0 %v508
        %628 = vmatprep.subr.mxu0 0.0
        %629 = vmatpush1.msra.mxu0 0.0
        %630 = vmatprep.subr.mxu0 0.0
        %631 = vmatpush1.msra.mxu0 0.0
        %632 = vmatprep.subr.mxu0 0.0
        %633 = vmatpush1.msra.mxu0 0.0
        %634 = vmatprep.subr.mxu0 0.0
        %635 = vmatpush1.msra.mxu0 0.0
        %636 = vmatprep.subr.mxu0 0.0
        %637 = vmatpush1.msra.mxu0 0.0
        %638 = vmatprep.subr.mxu0 0.0
        %639 = vmatpush1.msra.mxu0 0.0
        %640 = vmatprep.subr.mxu0 0.0
        %641 = vmatpush1.msra.mxu0 0.0
        %642 = vmatprep.subr.mxu0 0.0
        %643 = vmatpush1.msra.mxu0 0.0
        %644 = vmatprep.subr.mxu0 0.0
        %645 = vmatpush1.msra.mxu0 0.0
        %646 = vmatprep.subr.mxu0 0.0
        %647 = vmatpush1.msra.mxu0 0.0
        %648 = vmatprep.subr.mxu0 0.0
        %649 = vmatpush1.msra.mxu0 0.0
        %650 = vmatprep.subr.mxu0 0.0
        %651 = vmatpush1.msra.mxu0 0.0
        %652 = vmatprep.subr.mxu0 0.0
        %653 = vmatpush1.msra.mxu0 0.0
        %654 = vmatprep.subr.mxu0 0.0
        %655 = vmatpush1.msra.mxu0 0.0
        %656 = vmatprep.subr.mxu0 0.0
        %657 = vmatpush1.msra.mxu0 0.0
        %658 = vmatprep.subr.mxu0 0.0
        %659 = vmatpush1.msra.mxu0 0.0
        %660 = vmatprep.subr.mxu0 0.0
        %661 = vmatpush1.msra.mxu0 0.0
        %662 = vmatprep.subr.mxu0 0.0
        %663 = vmatpush1.msra.mxu0 0.0
        %664 = vmatprep.subr.mxu0 0.0
        %665 = vmatpush1.msra.mxu0 0.0
        %666 = vmatprep.subr.mxu0 0.0
        %667 = vmatpush1.msra.mxu0 0.0
        %668 = vmatprep.subr.mxu0 0.0
        %669 = vmatpush1.msra.mxu0 0.0
        %670 = vmatprep.subr.mxu0 0.0
        %671 = vmatpush1.msra.mxu0 0.0
        %672 = vmatprep.subr.mxu0 0.0
        %673 = vmatpush1.msra.mxu0 0.0
        %674 = vmatprep.subr.mxu0 0.0
        %675 = vmatpush1.msra.mxu0 0.0
        %676 = vmatprep.subr.mxu0 0.0
        %677 = vmatpush1.msra.mxu0 0.0
        %678 = vmatprep.subr.mxu0 0.0
        %679 = vmatpush1.msra.mxu0 0.0
        %680 = vmatprep.subr.mxu0 0.0
        %681 = vmatpush1.msra.mxu0 0.0
        %682 = vmatprep.subr.mxu0 0.0
        %683 = vmatpush1.msra.mxu0 0.0
        %684 = vmatprep.mubr.f32.mxu0 0.0
        %685 = vmatmul.mubr.f32.gmra.mrb[0].mxu0 %v618
        %v686 = vpop.f32.mrb[0].mxu0
        %v687 = vadd.f32 0.0, %v686
        %v688 = vpop.f32.mrb[0].mxu0
        %689 = vdwg.mxu0
        %v690 = vsel %vm617, %v452, 0
        %692 = vmatprep.subr.mxu0 0.0
        %693 = vmatpush1.msra.mxu0 %v537
        %694 = vmatprep.subr.mxu0 0.0
        %695 = vmatpush1.msra.mxu0 %v538
        %696 = vmatprep.subr.mxu0 0.0
        %697 = vmatpush1.msra.mxu0 %v539
        %698 = vmatprep.subr.mxu0 0.0
        %699 = vmatpush1.msra.mxu0 %v540
        %700 = vmatprep.subr.mxu0 0.0
        %701 = vmatpush1.msra.mxu0 0.0
        %702 = vmatprep.subr.mxu0 0.0
        %703 = vmatpush1.msra.mxu0 0.0
        %704 = vmatprep.subr.mxu0 0.0
        %705 = vmatpush1.msra.mxu0 0.0
        %706 = vmatprep.subr.mxu0 0.0
        %707 = vmatpush1.msra.mxu0 0.0
        %708 = vmatprep.subr.mxu0 0.0
        %709 = vmatpush1.msra.mxu0 0.0
        %710 = vmatprep.subr.mxu0 0.0
        %711 = vmatpush1.msra.mxu0 0.0
        %712 = vmatprep.subr.mxu0 0.0
        %713 = vmatpush1.msra.mxu0 0.0
        %714 = vmatprep.subr.mxu0 0.0
        %715 = vmatpush1.msra.mxu0 0.0
        %716 = vmatprep.subr.mxu0 0.0
        %717 = vmatpush1.msra.mxu0 0.0
        %718 = vmatprep.subr.mxu0 0.0
        %719 = vmatpush1.msra.mxu0 0.0
        %720 = vmatprep.subr.mxu0 0.0
        %721 = vmatpush1.msra.mxu0 0.0
        %722 = vmatprep.subr.mxu0 0.0
        %723 = vmatpush1.msra.mxu0 0.0
        %724 = vmatprep.subr.mxu0 0.0
        %725 = vmatpush1.msra.mxu0 0.0
        %726 = vmatprep.subr.mxu0 0.0
        %727 = vmatpush1.msra.mxu0 0.0
        %728 = vmatprep.subr.mxu0 0.0
        %729 = vmatpush1.msra.mxu0 0.0
        %730 = vmatprep.subr.mxu0 0.0
        %731 = vmatpush1.msra.mxu0 0.0
        %732 = vmatprep.subr.mxu0 0.0
        %733 = vmatpush1.msra.mxu0 0.0
        %734 = vmatprep.subr.mxu0 0.0
        %735 = vmatpush1.msra.mxu0 0.0
        %736 = vmatprep.subr.mxu0 0.0
        %737 = vmatpush1.msra.mxu0 0.0
        %738 = vmatprep.subr.mxu0 0.0
        %739 = vmatpush1.msra.mxu0 0.0
        %740 = vmatprep.subr.mxu0 0.0
        %741 = vmatpush1.msra.mxu0 0.0
        %742 = vmatprep.subr.mxu0 0.0
        %743 = vmatpush1.msra.mxu0 0.0
        %744 = vmatprep.subr.mxu0 0.0
        %745 = vmatpush1.msra.mxu0 0.0
        %746 = vmatprep.subr.mxu0 0.0
        %747 = vmatpush1.msra.mxu0 0.0
        %748 = vmatprep.subr.mxu0 0.0
        %749 = vmatpush1.msra.mxu0 0.0
        %750 = vmatprep.subr.mxu0 0.0
        %751 = vmatpush1.msra.mxu0 0.0
        %752 = vmatprep.subr.mxu0 0.0
        %753 = vmatpush1.msra.mxu0 0.0
        %754 = vmatprep.subr.mxu0 0.0
        %755 = vmatpush1.msra.mxu0 0.0
        %756 = vmatprep.mubr.f32.mxu0 0.0
        %757 = vmatmul.mubr.f32.gmra.mrb[0].mxu0 %v690
        %v758 = vpop.f32.mrb[0].mxu0
        %v759 = vadd.f32 0.0, %v758
        %v760 = vpop.f32.mrb[0].mxu0
        %761 = vdwg.mxu0
        %v762 = vsel %vm617, %v454, 0
        %764 = vmatprep.subr.mxu0 0.0
        %765 = vmatpush1.msra.mxu0 %v569
        %766 = vmatprep.subr.mxu0 0.0
        %767 = vmatpush1.msra.mxu0 %v570
        %768 = vmatprep.subr.mxu0 0.0
        %769 = vmatpush1.msra.mxu0 %v571
        %770 = vmatprep.subr.mxu0 0.0
        %771 = vmatpush1.msra.mxu0 %v572
        %772 = vmatprep.subr.mxu0 0.0
        %773 = vmatpush1.msra.mxu0 0.0
        %774 = vmatprep.subr.mxu0 0.0
        %775 = vmatpush1.msra.mxu0 0.0
        %776 = vmatprep.subr.mxu0 0.0
        %777 = vmatpush1.msra.mxu0 0.0
        %778 = vmatprep.subr.mxu0 0.0
        %779 = vmatpush1.msra.mxu0 0.0
        %780 = vmatprep.subr.mxu0 0.0
        %781 = vmatpush1.msra.mxu0 0.0
        %782 = vmatprep.subr.mxu0 0.0
        %783 = vmatpush1.msra.mxu0 0.0
        %784 = vmatprep.subr.mxu0 0.0
        %785 = vmatpush1.msra.mxu0 0.0
        %786 = vmatprep.subr.mxu0 0.0
        %787 = vmatpush1.msra.mxu0 0.0
        %788 = vmatprep.subr.mxu0 0.0
        %789 = vmatpush1.msra.mxu0 0.0
        %790 = vmatprep.subr.mxu0 0.0
        %791 = vmatpush1.msra.mxu0 0.0
        %792 = vmatprep.subr.mxu0 0.0
        %793 = vmatpush1.msra.mxu0 0.0
        %794 = vmatprep.subr.mxu0 0.0
        %795 = vmatpush1.msra.mxu0 0.0
        %796 = vmatprep.subr.mxu0 0.0
        %797 = vmatpush1.msra.mxu0 0.0
        %798 = vmatprep.subr.mxu0 0.0
        %799 = vmatpush1.msra.mxu0 0.0
        %800 = vmatprep.subr.mxu0 0.0
        %801 = vmatpush1.msra.mxu0 0.0
        %802 = vmatprep.subr.mxu0 0.0
        %803 = vmatpush1.msra.mxu0 0.0
        %804 = vmatprep.subr.mxu0 0.0
        %805 = vmatpush1.msra.mxu0 0.0
        %806 = vmatprep.subr.mxu0 0.0
        %807 = vmatpush1.msra.mxu0 0.0
        %808 = vmatprep.subr.mxu0 0.0
        %809 = vmatpush1.msra.mxu0 0.0
        %810 = vmatprep.subr.mxu0 0.0
        %811 = vmatpush1.msra.mxu0 0.0
        %812 = vmatprep.subr.mxu0 0.0
        %813 = vmatpush1.msra.mxu0 0.0
        %814 = vmatprep.subr.mxu0 0.0
        %815 = vmatpush1.msra.mxu0 0.0
        %816 = vmatprep.subr.mxu0 0.0
        %817 = vmatpush1.msra.mxu0 0.0
        %818 = vmatprep.subr.mxu0 0.0
        %819 = vmatpush1.msra.mxu0 0.0
        %820 = vmatprep.subr.mxu0 0.0
        %821 = vmatpush1.msra.mxu0 0.0
        %822 = vmatprep.subr.mxu0 0.0
        %823 = vmatpush1.msra.mxu0 0.0
        %824 = vmatprep.subr.mxu0 0.0
        %825 = vmatpush1.msra.mxu0 0.0
        %826 = vmatprep.subr.mxu0 0.0
        %827 = vmatpush1.msra.mxu0 0.0
        %828 = vmatprep.mubr.f32.mxu0 0.0
        %829 = vmatmul.mubr.f32.gmra.mrb[0].mxu0 %v762
        %v830 = vpop.f32.mrb[0].mxu0
        %v831 = vadd.f32 0.0, %v830
        %v832 = vpop.f32.mrb[0].mxu0
        %833 = vdwg.mxu0
        %v834 = vsel %vm617, %v456, 0
        %836 = vmatprep.subr.mxu0 0.0
        %837 = vmatpush1.msra.mxu0 %v601
        %838 = vmatprep.subr.mxu0 0.0
        %839 = vmatpush1.msra.mxu0 %v602
        %840 = vmatprep.subr.mxu0 0.0
        %841 = vmatpush1.msra.mxu0 %v603
        %842 = vmatprep.subr.mxu0 0.0
        %843 = vmatpush1.msra.mxu0 %v604
        %844 = vmatprep.subr.mxu0 0.0
        %845 = vmatpush1.msra.mxu0 0.0
        %846 = vmatprep.subr.mxu0 0.0
        %847 = vmatpush1.msra.mxu0 0.0
        %848 = vmatprep.subr.mxu0 0.0
        %849 = vmatpush1.msra.mxu0 0.0
        %850 = vmatprep.subr.mxu0 0.0
        %851 = vmatpush1.msra.mxu0 0.0
        %852 = vmatprep.subr.mxu0 0.0
        %853 = vmatpush1.msra.mxu0 0.0
        %854 = vmatprep.subr.mxu0 0.0
        %855 = vmatpush1.msra.mxu0 0.0
        %856 = vmatprep.subr.mxu0 0.0
        %857 = vmatpush1.msra.mxu0 0.0
        %858 = vmatprep.subr.mxu0 0.0
        %859 = vmatpush1.msra.mxu0 0.0
        %860 = vmatprep.subr.mxu0 0.0
        %861 = vmatpush1.msra.mxu0 0.0
        %862 = vmatprep.subr.mxu0 0.0
        %863 = vmatpush1.msra.mxu0 0.0
        %864 = vmatprep.subr.mxu0 0.0
        %865 = vmatpush1.msra.mxu0 0.0
        %866 = vmatprep.subr.mxu0 0.0
        %867 = vmatpush1.msra.mxu0 0.0
        %868 = vmatprep.subr.mxu0 0.0
        %869 = vmatpush1.msra.mxu0 0.0
        %870 = vmatprep.subr.mxu0 0.0
        %871 = vmatpush1.msra.mxu0 0.0
        %872 = vmatprep.subr.mxu0 0.0
        %873 = vmatpush1.msra.mxu0 0.0
        %874 = vmatprep.subr.mxu0 0.0
        %875 = vmatpush1.msra.mxu0 0.0
        %876 = vmatprep.subr.mxu0 0.0
        %877 = vmatpush1.msra.mxu0 0.0
        %878 = vmatprep.subr.mxu0 0.0
        %879 = vmatpush1.msra.mxu0 0.0
        %880 = vmatprep.subr.mxu0 0.0
        %881 = vmatpush1.msra.mxu0 0.0
        %882 = vmatprep.subr.mxu0 0.0
        %883 = vmatpush1.msra.mxu0 0.0
        %884 = vmatprep.subr.mxu0 0.0
        %885 = vmatpush1.msra.mxu0 0.0
        %886 = vmatprep.subr.mxu0 0.0
        %887 = vmatpush1.msra.mxu0 0.0
        %888 = vmatprep.subr.mxu0 0.0
        %889 = vmatpush1.msra.mxu0 0.0
        %890 = vmatprep.subr.mxu0 0.0
        %891 = vmatpush1.msra.mxu0 0.0
        %892 = vmatprep.subr.mxu0 0.0
        %893 = vmatpush1.msra.mxu0 0.0
        %894 = vmatprep.subr.mxu0 0.0
        %895 = vmatpush1.msra.mxu0 0.0
        %896 = vmatprep.subr.mxu0 0.0
        %897 = vmatpush1.msra.mxu0 0.0
        %898 = vmatprep.subr.mxu0 0.0
        %899 = vmatpush1.msra.mxu0 0.0
        %900 = vmatprep.mubr.f32.mxu0 0.0
        %901 = vmatmul.mubr.f32.gmra.mrb[0].mxu0 %v834
        %v902 = vpop.f32.mrb[0].mxu0
        %v903 = vadd.f32 0.0, %v902
        %v904 = vpop.f32.mrb[0].mxu0
        %905 = vdwg.mxu0
        %v906 = vmul.f32 %v687, 0.35355338
        %v907 = vmul.f32 %v759, 0.35355338
        %v908 = vmul.f32 %v831, 0.35355338
        %v909 = vmul.f32 %v903, 0.35355338
        %vm910 = vcmask 64512
        %v911 = vsel %vm910, %v906, -inf
        %912 = vmax.xlane.f32.xlu0 %v911
        %v913 = vpop.xlane.xlu0 %912
        %v914 = vsel %vm910, %v907, -inf
        %915 = vmax.xlane.f32.xlu0 %v914
        %v916 = vpop.xlane.xlu0 %915
        %v917 = vsel %vm910, %v908, -inf
        %918 = vmax.xlane.f32.xlu0 %v917
        %v919 = vpop.xlane.xlu0 %918
        %v920 = vsel %vm910, %v909, -inf
        %921 = vmax.xlane.f32.xlu0 %v920
        %v922 = vpop.xlane.xlu0 %921
        %v923 = vsub.f32 %v906, %v913
        %v924 = vsub.f32 %v907, %v916
        %v925 = vsub.f32 %v908, %v919
        %v926 = vsub.f32 %v909, %v922
        %v927 = vmul.f32 %v923, 1.442695
        %v928 = vpow.pop %v927
        %v929 = vmul.f32 %v924, 1.442695
        %v930 = vpow.pop %v929
        %v931 = vmul.f32 %v925, 1.442695
        %v932 = vpow.pop %v931
        %v933 = vmul.f32 %v926, 1.442695
        %v934 = vpow.pop %v933
        %v935 = vsel %vm910, %v928, 0.0
        %936 = vadd.xlane.f32.xlu0 %v935
        %v937 = vpop.xlane.xlu0 %936
        %v938 = vsel %vm910, %v930, 0.0
        %939 = vadd.xlane.f32.xlu0 %v938
        %v940 = vpop.xlane.xlu0 %939
        %v941 = vsel %vm910, %v932, 0.0
        %942 = vadd.xlane.f32.xlu0 %v941
        %v943 = vpop.xlane.xlu0 %942
        %v944 = vsel %vm910, %v934, 0.0
        %945 = vadd.xlane.f32.xlu0 %v944
        %v946 = vpop.xlane.xlu0 %945
        %v947 = vrcp.pop %v937
        %v948 = vrcp.pop %v940
        %v949 = vrcp.pop %v943
        %v950 = vrcp.pop %v946
        %v951 = vmul.f32 %v928, %v947
        %v952 = vmul.f32 %v930, %v948
        %v953 = vmul.f32 %v932, %v949
        %v954 = vmul.f32 %v934, %v950
        %955 = vxpose.xlu0.b32.start [1/16] %v478, 128
        %956 = vxpose.xlu0.b32.cont [2/16] 0.0, 128
        %957 = vxpose.xlu0.b32.cont [3/16] 0.0, 128
        %958 = vxpose.xlu0.b32.cont [4/16] 0.0, 128
        %959 = vxpose.xlu0.b32.cont [5/16] 0.0, 128
        %960 = vxpose.xlu0.b32.cont [6/16] 0.0, 128
        %961 = vxpose.xlu0.b32.cont [7/16] 0.0, 128
        %962 = vxpose.xlu0.b32.cont [8/16] 0.0, 128
        %963 = vxpose.xlu0.b32.cont [9/16] 0.0, 128
        %964 = vxpose.xlu0.b32.cont [10/16] 0.0, 128
        %965 = vxpose.xlu0.b32.cont [11/16] 0.0, 128
        %966 = vxpose.xlu0.b32.cont [12/16] 0.0, 128
        %967 = vxpose.xlu0.b32.cont [13/16] 0.0, 128
        %968 = vxpose.xlu0.b32.cont [14/16] 0.0, 128
        %969 = vxpose.xlu0.b32.cont [15/16] 0.0, 128
        %970 = vxpose.xlu0.b32.end [16/16] 0.0, 128
        %v971 = vpop.trf.xlu0
        %v972 = vpop.trf.xlu0
        %v973 = vpop.trf.xlu0
        %v974 = vpop.trf.xlu0
        %v975 = vpop.trf.xlu0
        %v976 = vpop.trf.xlu0
        %v977 = vpop.trf.xlu0
        %v978 = vpop.trf.xlu0
        %v979 = vpop.trf.xlu0
        %v980 = vpop.trf.xlu0
        %v981 = vpop.trf.xlu0
        %v982 = vpop.trf.xlu0
        %v983 = vpop.trf.xlu0
        %v984 = vpop.trf.xlu0
        %v985 = vpop.trf.xlu0
        %v986 = vpop.trf.xlu0
        %987 = vxpose.xlu0.b32.start [1/16] %v481, 128
        %988 = vxpose.xlu0.b32.cont [2/16] 0.0, 128
        %989 = vxpose.xlu0.b32.cont [3/16] 0.0, 128
        %990 = vxpose.xlu0.b32.cont [4/16] 0.0, 128
        %991 = vxpose.xlu0.b32.cont [5/16] 0.0, 128
        %992 = vxpose.xlu0.b32.cont [6/16] 0.0, 128
        %993 = vxpose.xlu0.b32.cont [7/16] 0.0, 128
        %994 = vxpose.xlu0.b32.cont [8/16] 0.0, 128
        %995 = vxpose.xlu0.b32.cont [9/16] 0.0, 128
        %996 = vxpose.xlu0.b32.cont [10/16] 0.0, 128
        %997 = vxpose.xlu0.b32.cont [11/16] 0.0, 128
        %998 = vxpose.xlu0.b32.cont [12/16] 0.0, 128
        %999 = vxpose.xlu0.b32.cont [13/16] 0.0, 128
        %1000 = vxpose.xlu0.b32.cont [14/16] 0.0, 128
        %1001 = vxpose.xlu0.b32.cont [15/16] 0.0, 128
        %1002 = vxpose.xlu0.b32.end [16/16] 0.0, 128
        %v1003 = vpop.trf.xlu0
        %v1004 = vpop.trf.xlu0
        %v1005 = vpop.trf.xlu0
        %v1006 = vpop.trf.xlu0
        %v1007 = vpop.trf.xlu0
        %v1008 = vpop.trf.xlu0
        %v1009 = vpop.trf.xlu0
        %v1010 = vpop.trf.xlu0
        %v1011 = vpop.trf.xlu0
        %v1012 = vpop.trf.xlu0
        %v1013 = vpop.trf.xlu0
        %v1014 = vpop.trf.xlu0
        %v1015 = vpop.trf.xlu0
        %v1016 = vpop.trf.xlu0
        %v1017 = vpop.trf.xlu0
        %v1018 = vpop.trf.xlu0
        %1019 = vxpose.xlu0.b32.start [1/16] %v484, 128
        %1020 = vxpose.xlu0.b32.cont [2/16] 0.0, 128
        %1021 = vxpose.xlu0.b32.cont [3/16] 0.0, 128
        %1022 = vxpose.xlu0.b32.cont [4/16] 0.0, 128
        %1023 = vxpose.xlu0.b32.cont [5/16] 0.0, 128
        %1024 = vxpose.xlu0.b32.cont [6/16] 0.0, 128
        %1025 = vxpose.xlu0.b32.cont [7/16] 0.0, 128
        %1026 = vxpose.xlu0.b32.cont [8/16] 0.0, 128
        %1027 = vxpose.xlu0.b32.cont [9/16] 0.0, 128
        %1028 = vxpose.xlu0.b32.cont [10/16] 0.0, 128
        %1029 = vxpose.xlu0.b32.cont [11/16] 0.0, 128
        %1030 = vxpose.xlu0.b32.cont [12/16] 0.0, 128
        %1031 = vxpose.xlu0.b32.cont [13/16] 0.0, 128
        %1032 = vxpose.xlu0.b32.cont [14/16] 0.0, 128
        %1033 = vxpose.xlu0.b32.cont [15/16] 0.0, 128
        %1034 = vxpose.xlu0.b32.end [16/16] 0.0, 128
        %v1035 = vpop.trf.xlu0
        %v1036 = vpop.trf.xlu0
        %v1037 = vpop.trf.xlu0
        %v1038 = vpop.trf.xlu0
        %v1039 = vpop.trf.xlu0
        %v1040 = vpop.trf.xlu0
        %v1041 = vpop.trf.xlu0
        %v1042 = vpop.trf.xlu0
        %v1043 = vpop.trf.xlu0
        %v1044 = vpop.trf.xlu0
        %v1045 = vpop.trf.xlu0
        %v1046 = vpop.trf.xlu0
        %v1047 = vpop.trf.xlu0
        %v1048 = vpop.trf.xlu0
        %v1049 = vpop.trf.xlu0
        %v1050 = vpop.trf.xlu0
        %1051 = vxpose.xlu0.b32.start [1/16] %v487, 128
        %1052 = vxpose.xlu0.b32.cont [2/16] 0.0, 128
        %1053 = vxpose.xlu0.b32.cont [3/16] 0.0, 128
        %1054 = vxpose.xlu0.b32.cont [4/16] 0.0, 128
        %1055 = vxpose.xlu0.b32.cont [5/16] 0.0, 128
        %1056 = vxpose.xlu0.b32.cont [6/16] 0.0, 128
        %1057 = vxpose.xlu0.b32.cont [7/16] 0.0, 128
        %1058 = vxpose.xlu0.b32.cont [8/16] 0.0, 128
        %1059 = vxpose.xlu0.b32.cont [9/16] 0.0, 128
        %1060 = vxpose.xlu0.b32.cont [10/16] 0.0, 128
        %1061 = vxpose.xlu0.b32.cont [11/16] 0.0, 128
        %1062 = vxpose.xlu0.b32.cont [12/16] 0.0, 128
        %1063 = vxpose.xlu0.b32.cont [13/16] 0.0, 128
        %1064 = vxpose.xlu0.b32.cont [14/16] 0.0, 128
        %1065 = vxpose.xlu0.b32.cont [15/16] 0.0, 128
        %1066 = vxpose.xlu0.b32.end [16/16] 0.0, 128
        %v1067 = vpop.trf.xlu0
        %v1068 = vpop.trf.xlu0
        %v1069 = vpop.trf.xlu0
        %v1070 = vpop.trf.xlu0
        %v1071 = vpop.trf.xlu0
        %v1072 = vpop.trf.xlu0
        %v1073 = vpop.trf.xlu0
        %v1074 = vpop.trf.xlu0
        %v1075 = vpop.trf.xlu0
        %v1076 = vpop.trf.xlu0
        %v1077 = vpop.trf.xlu0
        %v1078 = vpop.trf.xlu0
        %v1079 = vpop.trf.xlu0
        %v1080 = vpop.trf.xlu0
        %v1081 = vpop.trf.xlu0
        %v1082 = vpop.trf.xlu0
        %v1084 = vsel %vm910, %v971, 0
        %v1087 = vsel %vm910, %v972, 0
        %v1090 = vsel %vm910, %v973, 0
        %v1093 = vsel %vm910, %v974, 0
        %v1096 = vsel %vm910, %v951, 0
        %1098 = vmatprep.subr.mxu0 0.0
        %1099 = vmatpush1.xpose.msra.mxu0 %v1096
        %1100 = vmatprep.subr.mxu0 0.0
        %1101 = vmatpush1.xpose.msra.mxu0 0.0
        %1102 = vmatprep.subr.mxu0 0.0
        %1103 = vmatpush1.xpose.msra.mxu0 0.0
        %1104 = vmatprep.subr.mxu0 0.0
        %1105 = vmatpush1.xpose.msra.mxu0 0.0
        %1106 = vmatprep.subr.mxu0 0.0
        %1107 = vmatpush1.xpose.msra.mxu0 0.0
        %1108 = vmatprep.subr.mxu0 0.0
        %1109 = vmatpush1.xpose.msra.mxu0 0.0
        %1110 = vmatprep.subr.mxu0 0.0
        %1111 = vmatpush1.xpose.msra.mxu0 0.0
        %1112 = vmatprep.subr.mxu0 0.0
        %1113 = vmatpush1.xpose.msra.mxu0 0.0
        %1114 = vmatprep.subr.mxu0 0.0
        %1115 = vmatpush1.xpose.msra.mxu0 0.0
        %1116 = vmatprep.subr.mxu0 0.0
        %1117 = vmatpush1.xpose.msra.mxu0 0.0
        %1118 = vmatprep.subr.mxu0 0.0
        %1119 = vmatpush1.xpose.msra.mxu0 0.0
        %1120 = vmatprep.subr.mxu0 0.0
        %1121 = vmatpush1.xpose.msra.mxu0 0.0
        %1122 = vmatprep.subr.mxu0 0.0
        %1123 = vmatpush1.xpose.msra.mxu0 0.0
        %1124 = vmatprep.subr.mxu0 0.0
        %1125 = vmatpush1.xpose.msra.mxu0 0.0
        %1126 = vmatprep.subr.mxu0 0.0
        %1127 = vmatpush1.xpose.msra.mxu0 0.0
        %1128 = vmatprep.subr.mxu0 0.0
        %1129 = vmatpush1.xpose.msra.mxu0 0.0
        %1130 = vmatprep.subr.mxu0 0.0
        %1131 = vmatpush1.xpose.msra.mxu0 0.0
        %1132 = vmatprep.subr.mxu0 0.0
        %1133 = vmatpush1.xpose.msra.mxu0 0.0
        %1134 = vmatprep.subr.mxu0 0.0
        %1135 = vmatpush1.xpose.msra.mxu0 0.0
        %1136 = vmatprep.subr.mxu0 0.0
        %1137 = vmatpush1.xpose.msra.mxu0 0.0
        %1138 = vmatprep.subr.mxu0 0.0
        %1139 = vmatpush1.xpose.msra.mxu0 0.0
        %1140 = vmatprep.subr.mxu0 0.0
        %1141 = vmatpush1.xpose.msra.mxu0 0.0
        %1142 = vmatprep.subr.mxu0 0.0
        %1143 = vmatpush1.xpose.msra.mxu0 0.0
        %1144 = vmatprep.subr.mxu0 0.0
        %1145 = vmatpush1.xpose.msra.mxu0 0.0
        %1146 = vmatprep.subr.mxu0 0.0
        %1147 = vmatpush1.xpose.msra.mxu0 0.0
        %1148 = vmatprep.subr.mxu0 0.0
        %1149 = vmatpush1.xpose.msra.mxu0 0.0
        %1150 = vmatprep.subr.mxu0 0.0
        %1151 = vmatpush1.xpose.msra.mxu0 0.0
        %1152 = vmatprep.subr.mxu0 0.0
        %1153 = vmatpush1.xpose.msra.mxu0 0.0
        %1154 = vmatprep.subr.mxu0 0.0
        %1155 = vmatpush1.xpose.msra.mxu0 0.0
        %1156 = vmatprep.subr.mxu0 0.0
        %1157 = vmatpush1.xpose.msra.mxu0 0.0
        %1158 = vmatprep.subr.mxu0 0.0
        %1159 = vmatpush1.xpose.msra.mxu0 0.0
        %1160 = vmatprep.subr.mxu0 0.0
        %1161 = vmatpush1.xpose.msra.mxu0 0.0
        %1162 = vmatprep.mubr.f32.mxu0 0.0
        %1163 = vmatmul.mubr.f32.gmra.mrb[0].mxu0 %v1084
        %v1164 = vpop.f32.mrb[0].mxu0
        %v1165 = vadd.f32 0.0, %v1164
        %v1166 = vpop.f32.mrb[0].mxu0
        %1167 = vmatprep.mubr.f32.mxu0 0.0
        %1168 = vmatmul.mubr.f32.gmra.mrb[0].mxu0 %v1087
        %v1169 = vpop.f32.mrb[0].mxu0
        %v1170 = vadd.f32 0.0, %v1169
        %v1171 = vpop.f32.mrb[0].mxu0
        %1172 = vmatprep.mubr.f32.mxu0 0.0
        %1173 = vmatmul.mubr.f32.gmra.mrb[0].mxu0 %v1090
        %v1174 = vpop.f32.mrb[0].mxu0
        %v1175 = vadd.f32 0.0, %v1174
        %v1176 = vpop.f32.mrb[0].mxu0
        %1177 = vmatprep.mubr.f32.mxu0 0.0
        %1178 = vmatmul.mubr.f32.gmra.mrb[0].mxu0 %v1093
        %v1179 = vpop.f32.mrb[0].mxu0
        %v1180 = vadd.f32 0.0, %v1179
        %v1181 = vpop.f32.mrb[0].mxu0
        %1182 = vdwg.mxu0
        %v1184 = vsel %vm910, %v1003, 0
        %v1187 = vsel %vm910, %v1004, 0
        %v1190 = vsel %vm910, %v1005, 0
        %v1193 = vsel %vm910, %v1006, 0
        %v1196 = vsel %vm910, %v952, 0
        %1198 = vmatprep.subr.mxu0 0.0
        %1199 = vmatpush1.xpose.msra.mxu0 %v1196
        %1200 = vmatprep.subr.mxu0 0.0
        %1201 = vmatpush1.xpose.msra.mxu0 0.0
        %1202 = vmatprep.subr.mxu0 0.0
        %1203 = vmatpush1.xpose.msra.mxu0 0.0
        %1204 = vmatprep.subr.mxu0 0.0
        %1205 = vmatpush1.xpose.msra.mxu0 0.0
        %1206 = vmatprep.subr.mxu0 0.0
        %1207 = vmatpush1.xpose.msra.mxu0 0.0
        %1208 = vmatprep.subr.mxu0 0.0
        %1209 = vmatpush1.xpose.msra.mxu0 0.0
        %1210 = vmatprep.subr.mxu0 0.0
        %1211 = vmatpush1.xpose.msra.mxu0 0.0
        %1212 = vmatprep.subr.mxu0 0.0
        %1213 = vmatpush1.xpose.msra.mxu0 0.0
        %1214 = vmatprep.subr.mxu0 0.0
        %1215 = vmatpush1.xpose.msra.mxu0 0.0
        %1216 = vmatprep.subr.mxu0 0.0
        %1217 = vmatpush1.xpose.msra.mxu0 0.0
        %1218 = vmatprep.subr.mxu0 0.0
        %1219 = vmatpush1.xpose.msra.mxu0 0.0
        %1220 = vmatprep.subr.mxu0 0.0
        %1221 = vmatpush1.xpose.msra.mxu0 0.0
        %1222 = vmatprep.subr.mxu0 0.0
        %1223 = vmatpush1.xpose.msra.mxu0 0.0
        %1224 = vmatprep.subr.mxu0 0.0
        %1225 = vmatpush1.xpose.msra.mxu0 0.0
        %1226 = vmatprep.subr.mxu0 0.0
        %1227 = vmatpush1.xpose.msra.mxu0 0.0
        %1228 = vmatprep.subr.mxu0 0.0
        %1229 = vmatpush1.xpose.msra.mxu0 0.0
        %1230 = vmatprep.subr.mxu0 0.0
        %1231 = vmatpush1.xpose.msra.mxu0 0.0
        %1232 = vmatprep.subr.mxu0 0.0
        %1233 = vmatpush1.xpose.msra.mxu0 0.0
        %1234 = vmatprep.subr.mxu0 0.0
        %1235 = vmatpush1.xpose.msra.mxu0 0.0
        %1236 = vmatprep.subr.mxu0 0.0
        %1237 = vmatpush1.xpose.msra.mxu0 0.0
        %1238 = vmatprep.subr.mxu0 0.0
        %1239 = vmatpush1.xpose.msra.mxu0 0.0
        %1240 = vmatprep.subr.mxu0 0.0
        %1241 = vmatpush1.xpose.msra.mxu0 0.0
        %1242 = vmatprep.subr.mxu0 0.0
        %1243 = vmatpush1.xpose.msra.mxu0 0.0
        %1244 = vmatprep.subr.mxu0 0.0
        %1245 = vmatpush1.xpose.msra.mxu0 0.0
        %1246 = vmatprep.subr.mxu0 0.0
        %1247 = vmatpush1.xpose.msra.mxu0 0.0
        %1248 = vmatprep.subr.mxu0 0.0
        %1249 = vmatpush1.xpose.msra.mxu0 0.0
        %1250 = vmatprep.subr.mxu0 0.0
        %1251 = vmatpush1.xpose.msra.mxu0 0.0
        %1252 = vmatprep.subr.mxu0 0.0
        %1253 = vmatpush1.xpose.msra.mxu0 0.0
        %1254 = vmatprep.subr.mxu0 0.0
        %1255 = vmatpush1.xpose.msra.mxu0 0.0
        %1256 = vmatprep.subr.mxu0 0.0
        %1257 = vmatpush1.xpose.msra.mxu0 0.0
        %1258 = vmatprep.subr.mxu0 0.0
        %1259 = vmatpush1.xpose.msra.mxu0 0.0
        %1260 = vmatprep.subr.mxu0 0.0
        %1261 = vmatpush1.xpose.msra.mxu0 0.0
        %1262 = vmatprep.mubr.f32.mxu0 0.0
        %1263 = vmatmul.mubr.f32.gmra.mrb[0].mxu0 %v1184
        %v1264 = vpop.f32.mrb[0].mxu0
        %v1265 = vadd.f32 0.0, %v1264
        %v1266 = vpop.f32.mrb[0].mxu0
        %1267 = vmatprep.mubr.f32.mxu0 0.0
        %1268 = vmatmul.mubr.f32.gmra.mrb[0].mxu0 %v1187
        %v1269 = vpop.f32.mrb[0].mxu0
        %v1270 = vadd.f32 0.0, %v1269
        %v1271 = vpop.f32.mrb[0].mxu0
        %1272 = vmatprep.mubr.f32.mxu0 0.0
        %1273 = vmatmul.mubr.f32.gmra.mrb[0].mxu0 %v1190
        %v1274 = vpop.f32.mrb[0].mxu0
        %v1275 = vadd.f32 0.0, %v1274
        %v1276 = vpop.f32.mrb[0].mxu0
        %1277 = vmatprep.mubr.f32.mxu0 0.0
        %1278 = vmatmul.mubr.f32.gmra.mrb[0].mxu0 %v1193
        %v1279 = vpop.f32.mrb[0].mxu0
        %v1280 = vadd.f32 0.0, %v1279
        %v1281 = vpop.f32.mrb[0].mxu0
        %1282 = vdwg.mxu0
        %v1284 = vsel %vm910, %v1035, 0
        %v1287 = vsel %vm910, %v1036, 0
        %v1290 = vsel %vm910, %v1037, 0
        %v1293 = vsel %vm910, %v1038, 0
        %v1296 = vsel %vm910, %v953, 0
        %1298 = vmatprep.subr.mxu0 0.0
        %1299 = vmatpush1.xpose.msra.mxu0 %v1296
        %1300 = vmatprep.subr.mxu0 0.0
        %1301 = vmatpush1.xpose.msra.mxu0 0.0
        %1302 = vmatprep.subr.mxu0 0.0
        %1303 = vmatpush1.xpose.msra.mxu0 0.0
        %1304 = vmatprep.subr.mxu0 0.0
        %1305 = vmatpush1.xpose.msra.mxu0 0.0
        %1306 = vmatprep.subr.mxu0 0.0
        %1307 = vmatpush1.xpose.msra.mxu0 0.0
        %1308 = vmatprep.subr.mxu0 0.0
        %1309 = vmatpush1.xpose.msra.mxu0 0.0
        %1310 = vmatprep.subr.mxu0 0.0
        %1311 = vmatpush1.xpose.msra.mxu0 0.0
        %1312 = vmatprep.subr.mxu0 0.0
        %1313 = vmatpush1.xpose.msra.mxu0 0.0
        %1314 = vmatprep.subr.mxu0 0.0
        %1315 = vmatpush1.xpose.msra.mxu0 0.0
        %1316 = vmatprep.subr.mxu0 0.0
        %1317 = vmatpush1.xpose.msra.mxu0 0.0
        %1318 = vmatprep.subr.mxu0 0.0
        %1319 = vmatpush1.xpose.msra.mxu0 0.0
        %1320 = vmatprep.subr.mxu0 0.0
        %1321 = vmatpush1.xpose.msra.mxu0 0.0
        %1322 = vmatprep.subr.mxu0 0.0
        %1323 = vmatpush1.xpose.msra.mxu0 0.0
        %1324 = vmatprep.subr.mxu0 0.0
        %1325 = vmatpush1.xpose.msra.mxu0 0.0
        %1326 = vmatprep.subr.mxu0 0.0
        %1327 = vmatpush1.xpose.msra.mxu0 0.0
        %1328 = vmatprep.subr.mxu0 0.0
        %1329 = vmatpush1.xpose.msra.mxu0 0.0
        %1330 = vmatprep.subr.mxu0 0.0
        %1331 = vmatpush1.xpose.msra.mxu0 0.0
        %1332 = vmatprep.subr.mxu0 0.0
        %1333 = vmatpush1.xpose.msra.mxu0 0.0
        %1334 = vmatprep.subr.mxu0 0.0
        %1335 = vmatpush1.xpose.msra.mxu0 0.0
        %1336 = vmatprep.subr.mxu0 0.0
        %1337 = vmatpush1.xpose.msra.mxu0 0.0
        %1338 = vmatprep.subr.mxu0 0.0
        %1339 = vmatpush1.xpose.msra.mxu0 0.0
        %1340 = vmatprep.subr.mxu0 0.0
        %1341 = vmatpush1.xpose.msra.mxu0 0.0
        %1342 = vmatprep.subr.mxu0 0.0
        %1343 = vmatpush1.xpose.msra.mxu0 0.0
        %1344 = vmatprep.subr.mxu0 0.0
        %1345 = vmatpush1.xpose.msra.mxu0 0.0
        %1346 = vmatprep.subr.mxu0 0.0
        %1347 = vmatpush1.xpose.msra.mxu0 0.0
        %1348 = vmatprep.subr.mxu0 0.0
        %1349 = vmatpush1.xpose.msra.mxu0 0.0
        %1350 = vmatprep.subr.mxu0 0.0
        %1351 = vmatpush1.xpose.msra.mxu0 0.0
        %1352 = vmatprep.subr.mxu0 0.0
        %1353 = vmatpush1.xpose.msra.mxu0 0.0
        %1354 = vmatprep.subr.mxu0 0.0
        %1355 = vmatpush1.xpose.msra.mxu0 0.0
        %1356 = vmatprep.subr.mxu0 0.0
        %1357 = vmatpush1.xpose.msra.mxu0 0.0
        %1358 = vmatprep.subr.mxu0 0.0
        %1359 = vmatpush1.xpose.msra.mxu0 0.0
        %1360 = vmatprep.subr.mxu0 0.0
        %1361 = vmatpush1.xpose.msra.mxu0 0.0
        %1362 = vmatprep.mubr.f32.mxu0 0.0
        %1363 = vmatmul.mubr.f32.gmra.mrb[0].mxu0 %v1284
        %v1364 = vpop.f32.mrb[0].mxu0
        %v1365 = vadd.f32 0.0, %v1364
        %v1366 = vpop.f32.mrb[0].mxu0
        %1367 = vmatprep.mubr.f32.mxu0 0.0
        %1368 = vmatmul.mubr.f32.gmra.mrb[0].mxu0 %v1287
        %v1369 = vpop.f32.mrb[0].mxu0
        %v1370 = vadd.f32 0.0, %v1369
        %v1371 = vpop.f32.mrb[0].mxu0
        %1372 = vmatprep.mubr.f32.mxu0 0.0
        %1373 = vmatmul.mubr.f32.gmra.mrb[0].mxu0 %v1290
        %v1374 = vpop.f32.mrb[0].mxu0
        %v1375 = vadd.f32 0.0, %v1374
        %v1376 = vpop.f32.mrb[0].mxu0
        %1377 = vmatprep.mubr.f32.mxu0 0.0
        %1378 = vmatmul.mubr.f32.gmra.mrb[0].mxu0 %v1293
        %v1379 = vpop.f32.mrb[0].mxu0
        %v1380 = vadd.f32 0.0, %v1379
        %v1381 = vpop.f32.mrb[0].mxu0
        %1382 = vdwg.mxu0
        %v1384 = vsel %vm910, %v1067, 0
        %v1387 = vsel %vm910, %v1068, 0
        %v1390 = vsel %vm910, %v1069, 0
        %v1393 = vsel %vm910, %v1070, 0
        %v1396 = vsel %vm910, %v954, 0
        %1398 = vmatprep.subr.mxu0 0.0
        %1399 = vmatpush1.xpose.msra.mxu0 %v1396
        %1400 = vmatprep.subr.mxu0 0.0
        %1401 = vmatpush1.xpose.msra.mxu0 0.0
        %1402 = vmatprep.subr.mxu0 0.0
        %1403 = vmatpush1.xpose.msra.mxu0 0.0
        %1404 = vmatprep.subr.mxu0 0.0
        %1405 = vmatpush1.xpose.msra.mxu0 0.0
        %1406 = vmatprep.subr.mxu0 0.0
        %1407 = vmatpush1.xpose.msra.mxu0 0.0
        %1408 = vmatprep.subr.mxu0 0.0
        %1409 = vmatpush1.xpose.msra.mxu0 0.0
        %1410 = vmatprep.subr.mxu0 0.0
        %1411 = vmatpush1.xpose.msra.mxu0 0.0
        %1412 = vmatprep.subr.mxu0 0.0
        %1413 = vmatpush1.xpose.msra.mxu0 0.0
        %1414 = vmatprep.subr.mxu0 0.0
        %1415 = vmatpush1.xpose.msra.mxu0 0.0
        %1416 = vmatprep.subr.mxu0 0.0
        %1417 = vmatpush1.xpose.msra.mxu0 0.0
        %1418 = vmatprep.subr.mxu0 0.0
        %1419 = vmatpush1.xpose.msra.mxu0 0.0
        %1420 = vmatprep.subr.mxu0 0.0
        %1421 = vmatpush1.xpose.msra.mxu0 0.0
        %1422 = vmatprep.subr.mxu0 0.0
        %1423 = vmatpush1.xpose.msra.mxu0 0.0
        %1424 = vmatprep.subr.mxu0 0.0
        %1425 = vmatpush1.xpose.msra.mxu0 0.0
        %1426 = vmatprep.subr.mxu0 0.0
        %1427 = vmatpush1.xpose.msra.mxu0 0.0
        %1428 = vmatprep.subr.mxu0 0.0
        %1429 = vmatpush1.xpose.msra.mxu0 0.0
        %1430 = vmatprep.subr.mxu0 0.0
        %1431 = vmatpush1.xpose.msra.mxu0 0.0
        %1432 = vmatprep.subr.mxu0 0.0
        %1433 = vmatpush1.xpose.msra.mxu0 0.0
        %1434 = vmatprep.subr.mxu0 0.0
        %1435 = vmatpush1.xpose.msra.mxu0 0.0
        %1436 = vmatprep.subr.mxu0 0.0
        %1437 = vmatpush1.xpose.msra.mxu0 0.0
        %1438 = vmatprep.subr.mxu0 0.0
        %1439 = vmatpush1.xpose.msra.mxu0 0.0
        %1440 = vmatprep.subr.mxu0 0.0
        %1441 = vmatpush1.xpose.msra.mxu0 0.0
        %1442 = vmatprep.subr.mxu0 0.0
        %1443 = vmatpush1.xpose.msra.mxu0 0.0
        %1444 = vmatprep.subr.mxu0 0.0
        %1445 = vmatpush1.xpose.msra.mxu0 0.0
        %1446 = vmatprep.subr.mxu0 0.0
        %1447 = vmatpush1.xpose.msra.mxu0 0.0
        %1448 = vmatprep.subr.mxu0 0.0
        %1449 = vmatpush1.xpose.msra.mxu0 0.0
        %1450 = vmatprep.subr.mxu0 0.0
        %1451 = vmatpush1.xpose.msra.mxu0 0.0
        %1452 = vmatprep.subr.mxu0 0.0
        %1453 = vmatpush1.xpose.msra.mxu0 0.0
        %1454 = vmatprep.subr.mxu0 0.0
        %1455 = vmatpush1.xpose.msra.mxu0 0.0
        %1456 = vmatprep.subr.mxu0 0.0
        %1457 = vmatpush1.xpose.msra.mxu0 0.0
        %1458 = vmatprep.subr.mxu0 0.0
        %1459 = vmatpush1.xpose.msra.mxu0 0.0
        %1460 = vmatprep.subr.mxu0 0.0
        %1461 = vmatpush1.xpose.msra.mxu0 0.0
        %1462 = vmatprep.mubr.f32.mxu0 0.0
        %1463 = vmatmul.mubr.f32.gmra.mrb[0].mxu0 %v1384
        %v1464 = vpop.f32.mrb[0].mxu0
        %v1465 = vadd.f32 0.0, %v1464
        %v1466 = vpop.f32.mrb[0].mxu0
        %1467 = vmatprep.mubr.f32.mxu0 0.0
        %1468 = vmatmul.mubr.f32.gmra.mrb[0].mxu0 %v1387
        %v1469 = vpop.f32.mrb[0].mxu0
        %v1470 = vadd.f32 0.0, %v1469
        %v1471 = vpop.f32.mrb[0].mxu0
        %1472 = vmatprep.mubr.f32.mxu0 0.0
        %1473 = vmatmul.mubr.f32.gmra.mrb[0].mxu0 %v1390
        %v1474 = vpop.f32.mrb[0].mxu0
        %v1475 = vadd.f32 0.0, %v1474
        %v1476 = vpop.f32.mrb[0].mxu0
        %1477 = vmatprep.mubr.f32.mxu0 0.0
        %1478 = vmatmul.mubr.f32.gmra.mrb[0].mxu0 %v1393
        %v1479 = vpop.f32.mrb[0].mxu0
        %v1480 = vadd.f32 0.0, %v1479
        %v1481 = vpop.f32.mrb[0].mxu0
        %1482 = vdwg.mxu0
        %1483 = vxpose.xlu0.b32.start [1/16] %v1165, 128
        %1484 = vxpose.xlu0.b32.cont [2/16] %v1170, 128
        %1485 = vxpose.xlu0.b32.cont [3/16] %v1175, 128
        %1486 = vxpose.xlu0.b32.cont [4/16] %v1180, 128
        %1487 = vxpose.xlu0.b32.cont [5/16] 0.0, 128
        %1488 = vxpose.xlu0.b32.cont [6/16] 0.0, 128
        %1489 = vxpose.xlu0.b32.cont [7/16] 0.0, 128
        %1490 = vxpose.xlu0.b32.cont [8/16] 0.0, 128
        %1491 = vxpose.xlu0.b32.cont [9/16] 0.0, 128
        %1492 = vxpose.xlu0.b32.cont [10/16] 0.0, 128
        %1493 = vxpose.xlu0.b32.cont [11/16] 0.0, 128
        %1494 = vxpose.xlu0.b32.cont [12/16] 0.0, 128
        %1495 = vxpose.xlu0.b32.cont [13/16] 0.0, 128
        %1496 = vxpose.xlu0.b32.cont [14/16] 0.0, 128
        %1497 = vxpose.xlu0.b32.cont [15/16] 0.0, 128
        %1498 = vxpose.xlu0.b32.end [16/16] 0.0, 128
        %v1499 = vpop.trf.xlu0
        %v1500 = vpop.trf.xlu0
        %v1501 = vpop.trf.xlu0
        %v1502 = vpop.trf.xlu0
        %v1503 = vpop.trf.xlu0
        %v1504 = vpop.trf.xlu0
        %v1505 = vpop.trf.xlu0
        %v1506 = vpop.trf.xlu0
        %v1507 = vpop.trf.xlu0
        %v1508 = vpop.trf.xlu0
        %v1509 = vpop.trf.xlu0
        %v1510 = vpop.trf.xlu0
        %v1511 = vpop.trf.xlu0
        %v1512 = vpop.trf.xlu0
        %v1513 = vpop.trf.xlu0
        %v1514 = vpop.trf.xlu0
        %1515 = vxpose.xlu0.b32.start [1/16] %v1265, 128
        %1516 = vxpose.xlu0.b32.cont [2/16] %v1270, 128
        %1517 = vxpose.xlu0.b32.cont [3/16] %v1275, 128
        %1518 = vxpose.xlu0.b32.cont [4/16] %v1280, 128
        %1519 = vxpose.xlu0.b32.cont [5/16] 0.0, 128
        %1520 = vxpose.xlu0.b32.cont [6/16] 0.0, 128
        %1521 = vxpose.xlu0.b32.cont [7/16] 0.0, 128
        %1522 = vxpose.xlu0.b32.cont [8/16] 0.0, 128
        %1523 = vxpose.xlu0.b32.cont [9/16] 0.0, 128
        %1524 = vxpose.xlu0.b32.cont [10/16] 0.0, 128
        %1525 = vxpose.xlu0.b32.cont [11/16] 0.0, 128
        %1526 = vxpose.xlu0.b32.cont [12/16] 0.0, 128
        %1527 = vxpose.xlu0.b32.cont [13/16] 0.0, 128
        %1528 = vxpose.xlu0.b32.cont [14/16] 0.0, 128
        %1529 = vxpose.xlu0.b32.cont [15/16] 0.0, 128
        %1530 = vxpose.xlu0.b32.end [16/16] 0.0, 128
        %v1531 = vpop.trf.xlu0
        %v1532 = vpop.trf.xlu0
        %v1533 = vpop.trf.xlu0
        %v1534 = vpop.trf.xlu0
        %v1535 = vpop.trf.xlu0
        %v1536 = vpop.trf.xlu0
        %v1537 = vpop.trf.xlu0
        %v1538 = vpop.trf.xlu0
        %v1539 = vpop.trf.xlu0
        %v1540 = vpop.trf.xlu0
        %v1541 = vpop.trf.xlu0
        %v1542 = vpop.trf.xlu0
        %v1543 = vpop.trf.xlu0
        %v1544 = vpop.trf.xlu0
        %v1545 = vpop.trf.xlu0
        %v1546 = vpop.trf.xlu0
        %1547 = vxpose.xlu0.b32.start [1/16] %v1365, 128
        %1548 = vxpose.xlu0.b32.cont [2/16] %v1370, 128
        %1549 = vxpose.xlu0.b32.cont [3/16] %v1375, 128
        %1550 = vxpose.xlu0.b32.cont [4/16] %v1380, 128
        %1551 = vxpose.xlu0.b32.cont [5/16] 0.0, 128
        %1552 = vxpose.xlu0.b32.cont [6/16] 0.0, 128
        %1553 = vxpose.xlu0.b32.cont [7/16] 0.0, 128
        %1554 = vxpose.xlu0.b32.cont [8/16] 0.0, 128
        %1555 = vxpose.xlu0.b32.cont [9/16] 0.0, 128
        %1556 = vxpose.xlu0.b32.cont [10/16] 0.0, 128
        %1557 = vxpose.xlu0.b32.cont [11/16] 0.0, 128
        %1558 = vxpose.xlu0.b32.cont [12/16] 0.0, 128
        %1559 = vxpose.xlu0.b32.cont [13/16] 0.0, 128
        %1560 = vxpose.xlu0.b32.cont [14/16] 0.0, 128
        %1561 = vxpose.xlu0.b32.cont [15/16] 0.0, 128
        %1562 = vxpose.xlu0.b32.end [16/16] 0.0, 128
        %v1563 = vpop.trf.xlu0
        %v1564 = vpop.trf.xlu0
        %v1565 = vpop.trf.xlu0
        %v1566 = vpop.trf.xlu0
        %v1567 = vpop.trf.xlu0
        %v1568 = vpop.trf.xlu0
        %v1569 = vpop.trf.xlu0
        %v1570 = vpop.trf.xlu0
        %v1571 = vpop.trf.xlu0
        %v1572 = vpop.trf.xlu0
        %v1573 = vpop.trf.xlu0
        %v1574 = vpop.trf.xlu0
        %v1575 = vpop.trf.xlu0
        %v1576 = vpop.trf.xlu0
        %v1577 = vpop.trf.xlu0
        %v1578 = vpop.trf.xlu0
        %1579 = vxpose.xlu0.b32.start [1/16] %v1465, 128
        %1580 = vxpose.xlu0.b32.cont [2/16] %v1470, 128
        %1581 = vxpose.xlu0.b32.cont [3/16] %v1475, 128
        %1582 = vxpose.xlu0.b32.cont [4/16] %v1480, 128
        %1583 = vxpose.xlu0.b32.cont [5/16] 0.0, 128
        %1584 = vxpose.xlu0.b32.cont [6/16] 0.0, 128
        %1585 = vxpose.xlu0.b32.cont [7/16] 0.0, 128
        %1586 = vxpose.xlu0.b32.cont [8/16] 0.0, 128
        %1587 = vxpose.xlu0.b32.cont [9/16] 0.0, 128
        %1588 = vxpose.xlu0.b32.cont [10/16] 0.0, 128
        %1589 = vxpose.xlu0.b32.cont [11/16] 0.0, 128
        %1590 = vxpose.xlu0.b32.cont [12/16] 0.0, 128
        %1591 = vxpose.xlu0.b32.cont [13/16] 0.0, 128
        %1592 = vxpose.xlu0.b32.cont [14/16] 0.0, 128
        %1593 = vxpose.xlu0.b32.cont [15/16] 0.0, 128
        %1594 = vxpose.xlu0.b32.end [16/16] 0.0, 128
        %v1595 = vpop.trf.xlu0
        %v1596 = vpop.trf.xlu0
        %v1597 = vpop.trf.xlu0
        %v1598 = vpop.trf.xlu0
        %v1599 = vpop.trf.xlu0
        %v1600 = vpop.trf.xlu0
        %v1601 = vpop.trf.xlu0
        %v1602 = vpop.trf.xlu0
        %v1603 = vpop.trf.xlu0
        %v1604 = vpop.trf.xlu0
        %v1605 = vpop.trf.xlu0
        %v1606 = vpop.trf.xlu0
        %v1607 = vpop.trf.xlu0
        %v1608 = vpop.trf.xlu0
        %v1609 = vpop.trf.xlu0
        %v1610 = vpop.trf.xlu0
        %v1611 = vcombine.low %v1499, %v1563
        %v1612 = vcombine.high %v1499, %v1563
        %v1614 = vunpack.c.l.s4 1983009808
        %v1615 = vunpack.c.0.s8 %v1614
        %v1616 = vlaneseq
        %v1617 = vshrl.u32 %v1616, 7
        %v1618 = vsub.s32 %v1615, %v1617
        %v1619 = vrot.slane %v1611, %v1618
        %v1621 = vunpack.c.l.s4 1983009808
        %v1622 = vunpack.c.0.s8 %v1621
        %v1623 = vlaneseq
        %v1624 = vshrl.u32 %v1623, 7
        %v1625 = vsub.s32 %v1622, %v1624
        %v1626 = vrot.slane %v1612, %v1625
        %v1627 = vcombine.low %v1531, %v1595
        %v1628 = vcombine.high %v1531, %v1595
        %v1630 = vunpack.c.l.s4 1983009808
        %v1631 = vunpack.c.0.s8 %v1630
        %v1632 = vlaneseq
        %v1633 = vshrl.u32 %v1632, 7
        %v1634 = vsub.s32 %v1631, %v1633
        %v1635 = vrot.slane %v1627, %v1634
        %v1637 = vunpack.c.l.s4 1983009808
        %v1638 = vunpack.c.0.s8 %v1637
        %v1639 = vlaneseq
        %v1640 = vshrl.u32 %v1639, 7
        %v1641 = vsub.s32 %v1638, %v1640
        %v1642 = vrot.slane %v1628, %v1641
        %v1643 = vcombine.low %v1619, %v1635
        %v1644 = vcombine.high %v1619, %v1635
        %v1646 = vunpack.c.l.s4 1934713408
        %v1647 = vunpack.c.0.s8 %v1646
        %v1648 = vlaneseq
        %v1649 = vshrl.u32 %v1648, 7
        %v1650 = vsub.s32 %v1647, %v1649
        %v1651 = vrot.slane %v1643, %v1650
        %v1653 = vunpack.c.l.s4 1934713408
        %v1654 = vunpack.c.0.s8 %v1653
        %v1655 = vlaneseq
        %v1656 = vshrl.u32 %v1655, 7
        %v1657 = vsub.s32 %v1654, %v1656
        %v1658 = vrot.slane %v1644, %v1657
        %v1659 = vcombine.low %v1626, %v1642
        %v1660 = vcombine.high %v1626, %v1642
        %v1662 = vunpack.c.l.s4 1934713408
        %v1663 = vunpack.c.0.s8 %v1662
        %v1664 = vlaneseq
        %v1665 = vshrl.u32 %v1664, 7
        %v1666 = vsub.s32 %v1663, %v1665
        %v1667 = vrot.slane %v1659, %v1666
        %v1669 = vunpack.c.l.s4 1934713408
        %v1670 = vunpack.c.0.s8 %v1669
        %v1671 = vlaneseq
        %v1672 = vshrl.u32 %v1671, 7
        %v1673 = vsub.s32 %v1670, %v1672
        %v1674 = vrot.slane %v1660, %v1673
        %v1675 = vcombine.high %v1651, 0.0
        %v1676 = vcombine.high %v1658, 0.0
        %v1677 = vcombine.high %v1667, 0.0
        %v1678 = vcombine.high %v1674, 0.0
        %v1679 = vcombine.low %v1651, %v1658
        %v1681 = vunpack.c.l.s4 1983009808
        %v1682 = vunpack.c.0.s8 %v1681
        %v1683 = vlaneseq
        %v1684 = vshrl.u32 %v1683, 7
        %v1685 = vsub.s32 %v1682, %v1684
        %v1686 = vrot.slane %v1679, %v1685
        %v1687 = vcombine.low %v1675, %v1676
        %v1689 = vunpack.c.l.s4 1983009808
        %v1690 = vunpack.c.0.s8 %v1689
        %v1691 = vlaneseq
        %v1692 = vshrl.u32 %v1691, 7
        %v1693 = vsub.s32 %v1690, %v1692
        %v1694 = vrot.slane %v1687, %v1693
        %v1695 = vcombine.low %v1667, %v1674
        %v1697 = vunpack.c.l.s4 1983009808
        %v1698 = vunpack.c.0.s8 %v1697
        %v1699 = vlaneseq
        %v1700 = vshrl.u32 %v1699, 7
        %v1701 = vsub.s32 %v1698, %v1700
        %v1702 = vrot.slane %v1695, %v1701
        %v1703 = vcombine.low %v1677, %v1678
        %v1705 = vunpack.c.l.s4 1983009808
        %v1706 = vunpack.c.0.s8 %v1705
        %v1707 = vlaneseq
        %v1708 = vshrl.u32 %v1707, 7
        %v1709 = vsub.s32 %v1706, %v1708
        %v1710 = vrot.slane %v1703, %v1709
        %v1711 = vcombine.low %v1686, %v1694
        %v1712 = vcombine.high %v1686, %v1694
        %v1714 = vunpack.c.l.s4 1934713408
        %v1715 = vunpack.c.0.s8 %v1714
        %v1716 = vlaneseq
        %v1717 = vshrl.u32 %v1716, 7
        %v1718 = vsub.s32 %v1715, %v1717
        %v1719 = vrot.slane %v1711, %v1718
        %v1721 = vunpack.c.l.s4 1934713408
        %v1722 = vunpack.c.0.s8 %v1721
        %v1723 = vlaneseq
        %v1724 = vshrl.u32 %v1723, 7
        %v1725 = vsub.s32 %v1722, %v1724
        %v1726 = vrot.slane %v1712, %v1725
        %v1727 = vcombine.low %v1702, %v1710
        %v1728 = vcombine.high %v1702, %v1710
        %v1730 = vunpack.c.l.s4 1934713408
        %v1731 = vunpack.c.0.s8 %v1730
        %v1732 = vlaneseq
        %v1733 = vshrl.u32 %v1732, 7
        %v1734 = vsub.s32 %v1731, %v1733
        %v1735 = vrot.slane %v1727, %v1734
        %v1737 = vunpack.c.l.s4 1934713408
        %v1738 = vunpack.c.0.s8 %v1737
        %v1739 = vlaneseq
        %v1740 = vshrl.u32 %v1739, 7
        %v1741 = vsub.s32 %v1738, %v1740
        %v1742 = vrot.slane %v1728, %v1741
        %v1743 = vcombine.low %v1719, %v1735
        %v1744 = vcombine.high %v1719, %v1735
        %v1745 = vcombine.low %v1726, %v1742
        %v1746 = vcombine.high %v1726, %v1742
        %1748 = vrot.lane.b32.xlu0 %v1744, 32
        %v1749 = vpop.permute.xlu0 %1748
        %1752 = vrot.lane.b32.xlu0 %v1745, 64
        %v1753 = vpop.permute.xlu0 %1752
        %1756 = vrot.lane.b32.xlu0 %v1746, 96
        %v1757 = vpop.permute.xlu0 %1756
        %v1759 = vsel %vm617, %v1743, %v1749
        %vm1760 = vcmask 523264
        %v1761 = vsel %vm1760, %v1759, %v1753
        %vm1762 = vcmask 785408
        %v1763 = vsel %vm1762, %v1761, %v1757
        %v1764 = vld [vmem:[#allocation5 + $0x18] sm:$0xff]
        %v1765 = vld [vmem:[#allocation5 + $0x48] sm:$0xff]
        %v1766 = vld [vmem:[#allocation5 + $0x78] sm:$0xff]
        %v1767 = vld [vmem:[#allocation5 + $0xa8] sm:$0xff]
        %v1768 = vld [vmem:[#allocation5 + $0xd8] sm:$0xff]
        %v1769 = vld [vmem:[#allocation5 + $0x108] sm:$0xff]
        %v1770 = vld [vmem:[#allocation5 + $0x138] sm:$0xff]
        %v1771 = vld [vmem:[#allocation5 + $0x168] sm:$0xff]
        %v1772 = vld [vmem:[#allocation5 + $0x198] sm:$0xff]
        %v1773 = vld [vmem:[#allocation5 + $0x1c8] sm:$0xff]
        %v1774 = vld [vmem:[#allocation5 + $0x1f8] sm:$0xff]
        %v1775 = vld [vmem:[#allocation5 + $0x228] sm:$0xff]
        %v1776 = vld [vmem:[#allocation5 + $0x258] sm:$0xff]
        %v1777 = vld [vmem:[#allocation5 + $0x288] sm:$0xff]
        %v1778 = vld [vmem:[#allocation5 + $0x2b8] sm:$0xff]
        %v1779 = vld [vmem:[#allocation5 + $0x2e8] sm:$0xff]
        %v1780 = vld [vmem:[#allocation7 + $0x3] sm:$0x1]
        %v1781 = vlaneseq
        %v1782 = vshrl.u32 %v1781, 7
        %v1783 = vsub.s32 0, %v1782
        %v1784 = vrot.slane %v1780, %v1783
        %1785 = vmatprep.subr.mxu0 0.0
        %1786 = vmatpush1.msra.mxu0 %v1764
        %1787 = vmatprep.subr.mxu0 0.0
        %1788 = vmatpush1.msra.mxu0 %v1765
        %1789 = vmatprep.subr.mxu0 0.0
        %1790 = vmatpush1.msra.mxu0 %v1766
        %1791 = vmatprep.subr.mxu0 0.0
        %1792 = vmatpush1.msra.mxu0 %v1767
        %1793 = vmatprep.subr.mxu0 0.0
        %1794 = vmatpush1.msra.mxu0 %v1768
        %1795 = vmatprep.subr.mxu0 0.0
        %1796 = vmatpush1.msra.mxu0 %v1769
        %1797 = vmatprep.subr.mxu0 0.0
        %1798 = vmatpush1.msra.mxu0 %v1770
        %1799 = vmatprep.subr.mxu0 0.0
        %1800 = vmatpush1.msra.mxu0 %v1771
        %1801 = vmatprep.subr.mxu0 0.0
        %1802 = vmatpush1.msra.mxu0 %v1772
        %1803 = vmatprep.subr.mxu0 0.0
        %1804 = vmatpush1.msra.mxu0 %v1773
        %1805 = vmatprep.subr.mxu0 0.0
        %1806 = vmatpush1.msra.mxu0 %v1774
        %1807 = vmatprep.subr.mxu0 0.0
        %1808 = vmatpush1.msra.mxu0 %v1775
        %1809 = vmatprep.subr.mxu0 0.0
        %1810 = vmatpush1.msra.mxu0 %v1776
        %1811 = vmatprep.subr.mxu0 0.0
        %1812 = vmatpush1.msra.mxu0 %v1777
        %1813 = vmatprep.subr.mxu0 0.0
        %1814 = vmatpush1.msra.mxu0 %v1778
        %1815 = vmatprep.subr.mxu0 0.0
        %1816 = vmatpush1.msra.mxu0 %v1779
        %1817 = vmatprep.subr.mxu0 0.0
        %1818 = vmatpush1.msra.mxu0 0.0
        %1819 = vmatprep.subr.mxu0 0.0
        %1820 = vmatpush1.msra.mxu0 0.0
        %1821 = vmatprep.subr.mxu0 0.0
        %1822 = vmatpush1.msra.mxu0 0.0
        %1823 = vmatprep.subr.mxu0 0.0
        %1824 = vmatpush1.msra.mxu0 0.0
        %1825 = vmatprep.subr.mxu0 0.0
        %1826 = vmatpush1.msra.mxu0 0.0
        %1827 = vmatprep.subr.mxu0 0.0
        %1828 = vmatpush1.msra.mxu0 0.0
        %1829 = vmatprep.subr.mxu0 0.0
        %1830 = vmatpush1.msra.mxu0 0.0
        %1831 = vmatprep.subr.mxu0 0.0
        %1832 = vmatpush1.msra.mxu0 0.0
        %1833 = vmatprep.subr.mxu0 0.0
        %1834 = vmatpush1.msra.mxu0 0.0
        %1835 = vmatprep.subr.mxu0 0.0
        %1836 = vmatpush1.msra.mxu0 0.0
        %1837 = vmatprep.subr.mxu0 0.0
        %1838 = vmatpush1.msra.mxu0 0.0
        %1839 = vmatprep.subr.mxu0 0.0
        %1840 = vmatpush1.msra.mxu0 0.0
        %1841 = vmatprep.subr.mxu0 0.0
        %1842 = vmatpush1.msra.mxu0 0.0
        %1843 = vmatprep.subr.mxu0 0.0
        %1844 = vmatpush1.msra.mxu0 0.0
        %1845 = vmatprep.subr.mxu0 0.0
        %1846 = vmatpush1.msra.mxu0 0.0
        %1847 = vmatprep.subr.mxu0 0.0
        %1848 = vmatpush1.msra.mxu0 0.0
        %1849 = vmatprep.mubr.f32.mxu0 0.0
        %1850 = vmatmul.mubr.f32.gmra.mrb[0].mxu0 %v1763
        %v1851 = vpop.f32.mrb[0].mxu0
        %v1852 = vadd.f32 %v1784, %v1851
        %v1853 = vpop.f32.mrb[0].mxu0
        %1854 = vdwg.mxu0
        %v1855 = vadd.f32 %v215, %v1852
        %v1856 = vld [vmem:[#allocation7 + $0x8] sm:$0x1]
        %v1857 = vld [vmem:[#allocation7 + $0x9] sm:$0x1]
        %v1858 = vmul.f32 %v1855, %v220
        %1859 = vadd.xlane.f32.xlu0 %v1858
        %v1860 = vpop.xlane.xlu0 %1859
        %v1861 = vmul.f32 %v1860, %v226
        %v1862 = vsub.f32 %v1855, %v1861
        %v1863 = vmul.f32 %v1862, %v220
        %v1864 = vmul.f32 %v1863, %v1863
        %1865 = vadd.xlane.f32.xlu0 %v1864
        %v1866 = vpop.xlane.xlu0 %1865
        %v1867 = vmul.f32 %v1866, %v233
        %v1868 = vrsqrt.pop %v1867
        %v1869 = vmul.f32 %v1867, %v1868
        %vm1870 = vcmp.eq.f32.partialorder %v1867, inf
        %v1871 = vsel %vm1870, %v1867, %v1869
        %vm1872 = vcmp.eq.f32.partialorder %v1867, 0.0
        %v1873 = vand.u32 %v1867, 2147483648
        %v1874 = vsel %vm1872, %v1873, %v1871
        %v1875 = vlaneseq
        %v1876 = vshrl.u32 %v1875, 7
        %v1877 = vsub.s32 0, %v1876
        %v1878 = vrot.slane %v1856, %v1877
        %v1879 = vmul.f32 %v1878, %v1862
        %v1880 = vadd.f32 %v1874, 1e-06
        %v1881 = vrcp.pop %v1880
        %v1882 = vmul.f32 %v1879, %v1881
        %v1883 = vlaneseq
        %v1884 = vshrl.u32 %v1883, 7
        %v1885 = vsub.s32 0, %v1884
        %v1886 = vrot.slane %v1857, %v1885
        %v1887 = vadd.f32 %v1882, %v1886
        %v1888 = vld [vmem:[#allocation5 + $0x20] sm:$0xff]
        %v1889 = vld [vmem:[#allocation5 + $0x50] sm:$0xff]
        %v1890 = vld [vmem:[#allocation5 + $0x80] sm:$0xff]
        %v1891 = vld [vmem:[#allocation5 + $0xb0] sm:$0xff]
        %v1892 = vld [vmem:[#allocation5 + $0xe0] sm:$0xff]
        %v1893 = vld [vmem:[#allocation5 + $0x110] sm:$0xff]
        %v1894 = vld [vmem:[#allocation5 + $0x140] sm:$0xff]
        %v1895 = vld [vmem:[#allocation5 + $0x170] sm:$0xff]
        %v1896 = vld [vmem:[#allocation5 + $0x1a0] sm:$0xff]
        %v1897 = vld [vmem:[#allocation5 + $0x1d0] sm:$0xff]
        %v1898 = vld [vmem:[#allocation5 + $0x200] sm:$0xff]
        %v1899 = vld [vmem:[#allocation5 + $0x230] sm:$0xff]
        %v1900 = vld [vmem:[#allocation5 + $0x260] sm:$0xff]
        %v1901 = vld [vmem:[#allocation5 + $0x290] sm:$0xff]
        %v1902 = vld [vmem:[#allocation5 + $0x2c0] sm:$0xff]
        %v1903 = vld [vmem:[#allocation5 + $0x2f0] sm:$0xff]
        %v1904 = vld [vmem:[#allocation7 + $0x4] sm:$0x1]
        %v1905 = vlaneseq
        %v1906 = vshrl.u32 %v1905, 7
        %v1907 = vsub.s32 0, %v1906
        %v1908 = vrot.slane %v1904, %v1907
        %1909 = vmatprep.subr.mxu0 0.0
        %1910 = vmatpush1.msra.mxu0 %v1888
        %1911 = vmatprep.subr.mxu0 0.0
        %1912 = vmatpush1.msra.mxu0 %v1889
        %1913 = vmatprep.subr.mxu0 0.0
        %1914 = vmatpush1.msra.mxu0 %v1890
        %1915 = vmatprep.subr.mxu0 0.0
        %1916 = vmatpush1.msra.mxu0 %v1891
        %1917 = vmatprep.subr.mxu0 0.0
        %1918 = vmatpush1.msra.mxu0 %v1892
        %1919 = vmatprep.subr.mxu0 0.0
        %1920 = vmatpush1.msra.mxu0 %v1893
        %1921 = vmatprep.subr.mxu0 0.0
        %1922 = vmatpush1.msra.mxu0 %v1894
        %1923 = vmatprep.subr.mxu0 0.0
        %1924 = vmatpush1.msra.mxu0 %v1895
        %1925 = vmatprep.subr.mxu0 0.0
        %1926 = vmatpush1.msra.mxu0 %v1896
        %1927 = vmatprep.subr.mxu0 0.0
        %1928 = vmatpush1.msra.mxu0 %v1897
        %1929 = vmatprep.subr.mxu0 0.0
        %1930 = vmatpush1.msra.mxu0 %v1898
        %1931 = vmatprep.subr.mxu0 0.0
        %1932 = vmatpush1.msra.mxu0 %v1899
        %1933 = vmatprep.subr.mxu0 0.0
        %1934 = vmatpush1.msra.mxu0 %v1900
        %1935 = vmatprep.subr.mxu0 0.0
        %1936 = vmatpush1.msra.mxu0 %v1901
        %1937 = vmatprep.subr.mxu0 0.0
        %1938 = vmatpush1.msra.mxu0 %v1902
        %1939 = vmatprep.subr.mxu0 0.0
        %1940 = vmatpush1.msra.mxu0 %v1903
        %1941 = vmatprep.subr.mxu0 0.0
        %1942 = vmatpush1.msra.mxu0 0.0
        %1943 = vmatprep.subr.mxu0 0.0
        %1944 = vmatpush1.msra.mxu0 0.0
        %1945 = vmatprep.subr.mxu0 0.0
        %1946 = vmatpush1.msra.mxu0 0.0
        %1947 = vmatprep.subr.mxu0 0.0
        %1948 = vmatpush1.msra.mxu0 0.0
        %1949 = vmatprep.subr.mxu0 0.0
        %1950 = vmatpush1.msra.mxu0 0.0
        %1951 = vmatprep.subr.mxu0 0.0
        %1952 = vmatpush1.msra.mxu0 0.0
        %1953 = vmatprep.subr.mxu0 0.0
        %1954 = vmatpush1.msra.mxu0 0.0
        %1955 = vmatprep.subr.mxu0 0.0
        %1956 = vmatpush1.msra.mxu0 0.0
        %1957 = vmatprep.subr.mxu0 0.0
        %1958 = vmatpush1.msra.mxu0 0.0
        %1959 = vmatprep.subr.mxu0 0.0
        %1960 = vmatpush1.msra.mxu0 0.0
        %1961 = vmatprep.subr.mxu0 0.0
        %1962 = vmatpush1.msra.mxu0 0.0
        %1963 = vmatprep.subr.mxu0 0.0
        %1964 = vmatpush1.msra.mxu0 0.0
        %1965 = vmatprep.subr.mxu0 0.0
        %1966 = vmatpush1.msra.mxu0 0.0
        %1967 = vmatprep.subr.mxu0 0.0
        %1968 = vmatpush1.msra.mxu0 0.0
        %1969 = vmatprep.subr.mxu0 0.0
        %1970 = vmatpush1.msra.mxu0 0.0
        %1971 = vmatprep.subr.mxu0 0.0
        %1972 = vmatpush1.msra.mxu0 0.0
        %1973 = vmatprep.mubr.f32.mxu0 0.0
        %1974 = vmatmul.mubr.f32.gmra.mrb[0].mxu0 %v1887
        %v1975 = vpop.f32.mrb[0].mxu0
        %v1976 = vadd.f32 %v1908, %v1975
        %v1977 = vpop.f32.mrb[0].mxu0
        %1978 = vdwg.mxu0
        %v1979 = vmax.f32 %v1976, 0.0
        %v1980 = vld [vmem:[#allocation5 + $0x28] sm:$0xff]
        %v1981 = vld [vmem:[#allocation5 + $0x58] sm:$0xff]
        %v1982 = vld [vmem:[#allocation5 + $0x88] sm:$0xff]
        %v1983 = vld [vmem:[#allocation5 + $0xb8] sm:$0xff]
        %v1984 = vld [vmem:[#allocation5 + $0xe8] sm:$0xff]
        %v1985 = vld [vmem:[#allocation5 + $0x118] sm:$0xff]
        %v1986 = vld [vmem:[#allocation5 + $0x148] sm:$0xff]
        %v1987 = vld [vmem:[#allocation5 + $0x178] sm:$0xff]
        %v1988 = vld [vmem:[#allocation5 + $0x1a8] sm:$0xff]
        %v1989 = vld [vmem:[#allocation5 + $0x1d8] sm:$0xff]
        %v1990 = vld [vmem:[#allocation5 + $0x208] sm:$0xff]
        %v1991 = vld [vmem:[#allocation5 + $0x238] sm:$0xff]
        %v1992 = vld [vmem:[#allocation5 + $0x268] sm:$0xff]
        %v1993 = vld [vmem:[#allocation5 + $0x298] sm:$0xff]
        %v1994 = vld [vmem:[#allocation5 + $0x2c8] sm:$0xff]
        %v1995 = vld [vmem:[#allocation5 + $0x2f8] sm:$0xff]
        %v1996 = vld [vmem:[#allocation7 + $0x5] sm:$0x1]
        %v1997 = vlaneseq
        %v1998 = vshrl.u32 %v1997, 7
        %v1999 = vsub.s32 0, %v1998
        %v2000 = vrot.slane %v1996, %v1999
        %2001 = vmatprep.subr.mxu0 0.0
        %2002 = vmatpush1.msra.mxu0 %v1980
        %2003 = vmatprep.subr.mxu0 0.0
        %2004 = vmatpush1.msra.mxu0 %v1981
        %2005 = vmatprep.subr.mxu0 0.0
        %2006 = vmatpush1.msra.mxu0 %v1982
        %2007 = vmatprep.subr.mxu0 0.0
        %2008 = vmatpush1.msra.mxu0 %v1983
        %2009 = vmatprep.subr.mxu0 0.0
        %2010 = vmatpush1.msra.mxu0 %v1984
        %2011 = vmatprep.subr.mxu0 0.0
        %2012 = vmatpush1.msra.mxu0 %v1985
        %2013 = vmatprep.subr.mxu0 0.0
        %2014 = vmatpush1.msra.mxu0 %v1986
        %2015 = vmatprep.subr.mxu0 0.0
        %2016 = vmatpush1.msra.mxu0 %v1987
        %2017 = vmatprep.subr.mxu0 0.0
        %2018 = vmatpush1.msra.mxu0 %v1988
        %2019 = vmatprep.subr.mxu0 0.0
        %2020 = vmatpush1.msra.mxu0 %v1989
        %2021 = vmatprep.subr.mxu0 0.0
        %2022 = vmatpush1.msra.mxu0 %v1990
        %2023 = vmatprep.subr.mxu0 0.0
        %2024 = vmatpush1.msra.mxu0 %v1991
        %2025 = vmatprep.subr.mxu0 0.0
        %2026 = vmatpush1.msra.mxu0 %v1992
        %2027 = vmatprep.subr.mxu0 0.0
        %2028 = vmatpush1.msra.mxu0 %v1993
        %2029 = vmatprep.subr.mxu0 0.0
        %2030 = vmatpush1.msra.mxu0 %v1994
        %2031 = vmatprep.subr.mxu0 0.0
        %2032 = vmatpush1.msra.mxu0 %v1995
        %2033 = vmatprep.subr.mxu0 0.0
        %2034 = vmatpush1.msra.mxu0 0.0
        %2035 = vmatprep.subr.mxu0 0.0
        %2036 = vmatpush1.msra.mxu0 0.0
        %2037 = vmatprep.subr.mxu0 0.0
        %2038 = vmatpush1.msra.mxu0 0.0
        %2039 = vmatprep.subr.mxu0 0.0
        %2040 = vmatpush1.msra.mxu0 0.0
        %2041 = vmatprep.subr.mxu0 0.0
        %2042 = vmatpush1.msra.mxu0 0.0
        %2043 = vmatprep.subr.mxu0 0.0
        %2044 = vmatpush1.msra.mxu0 0.0
        %2045 = vmatprep.subr.mxu0 0.0
        %2046 = vmatpush1.msra.mxu0 0.0
        %2047 = vmatprep.subr.mxu0 0.0
        %2048 = vmatpush1.msra.mxu0 0.0
        %2049 = vmatprep.subr.mxu0 0.0
        %2050 = vmatpush1.msra.mxu0 0.0
        %2051 = vmatprep.subr.mxu0 0.0
        %2052 = vmatpush1.msra.mxu0 0.0
        %2053 = vmatprep.subr.mxu0 0.0
        %2054 = vmatpush1.msra.mxu0 0.0
        %2055 = vmatprep.subr.mxu0 0.0
        %2056 = vmatpush1.msra.mxu0 0.0
        %2057 = vmatprep.subr.mxu0 0.0
        %2058 = vmatpush1.msra.mxu0 0.0
        %2059 = vmatprep.subr.mxu0 0.0
        %2060 = vmatpush1.msra.mxu0 0.0
        %2061 = vmatprep.subr.mxu0 0.0
        %2062 = vmatpush1.msra.mxu0 0.0
        %2063 = vmatprep.subr.mxu0 0.0
        %2064 = vmatpush1.msra.mxu0 0.0
        %2065 = vmatprep.mubr.f32.mxu0 0.0
        %2066 = vmatmul.mubr.f32.gmra.mrb[0].mxu0 %v1979
        %v2067 = vpop.f32.mrb[0].mxu0
        %v2068 = vadd.f32 %v2000, %v2067
        %v2069 = vpop.f32.mrb[0].mxu0
        %2070 = vdwg.mxu0
        %v2071 = vadd.f32 %v1855, %v2068
        %2072 = vst [vmem:[%s214] sm:$0xff] %v2071
        %s2073 = sand.u32 %s97, 1
        %s2074 = scalar_lea.sflag [#allocation4], %s2073
        %s2075 = sand.u32 %s97, 1
        %s2076 = smul.addr %s2075, 8
        %s2077 = scalar_lea.vmem [#allocation8], %s2076
        // Predicated region
        $region45: #{tpu_custom_call.1} parent=31 // pred_check
          %p2078 = pneg %p107
        $region46: #{tpu_custom_call.1} parent=31 // pred_check_branch
          %2080 = sbr.rel (%p2078) target = $region48
        $region47: #{tpu_custom_call.1} parent=31 // pred_region
          %s2082 = ssub.s32 128, 128
          %2083 = vsyncadd %s2074, %s2082
          %s2084 = smul.addr %s21, 128
          %s2085 = scalar_lea.hbm %s3, %s2084
          %s2087 = sshll.u32 %s2077, 4
          %s2088 = int_to_ptr.vmem [resolvable:$true] %s2087
          %2090 = dma.vmem_to_hbm [thread:$0]  %s2088, 128, %s2085, %s2074
        $region48: #{tpu_custom_call.1} parent=31 // pred_fallthru
          _
      $region32: #{tpu_custom_call.1} parent=5 // pred_fallthru
        _
      %p2091 = scmp.le.s32.totalorder 2, %s16
      // Predicated region
      $region49: #{tpu_custom_call.1} parent=5 // pred_check
        %p2092 = pneg %p2091
      $region50: #{tpu_custom_call.1} parent=5 // pred_check_branch
        %2094 = sbr.rel (%p2092) target = $region52
      $region51: #{tpu_custom_call.1} parent=5 // pred_region
        %s2095 = ssub.s32 %s16, 2
        // Predicated region
        $region53: #{tpu_custom_call.1} parent=51 // pred_check
          %p2096 = pneg %p113
        $region54: #{tpu_custom_call.1} parent=51 // pred_check_branch
          %2098 = sbr.rel (%p2096) target = $region56
        $region55: #{tpu_custom_call.1} parent=51 // pred_region
          %s2099 = sand.u32 %s98, 1
          %s2100 = scalar_lea.sflag [#allocation4], %s2099
          %s2101 = sand.u32 %s98, 1
          %s2102 = smul.addr %s2101, 8
          %s2103 = scalar_lea.vmem [#allocation8], %s2102
          %2104 = dma.done %s2100, 128
        $region56: #{tpu_custom_call.1} parent=51 // pred_fallthru
          _
      $region52: #{tpu_custom_call.1} parent=5 // pred_fallthru
        _
    $region6: #{tpu_custom_call.1} parent=1 // loop_footer
      %s20 = sadd.s32 1, %s16
    $region7: #{tpu_custom_call.1} parent=1 // loop_footer_branch
      %15 = sbr.rel target = $region3
    $region8: #{tpu_custom_call.1} parent=1 // loop_exit
      _
    %2105 = vsyncpa [#allocation3], 1
    %s2106 = scalar_lea.sflag [#allocation3], 1
    %2107 = vsyncpa %s2106, 1
    %2108 = vsyncpa [#allocation6], 1
    %2109 = vsyncpa [#allocation4], 1
    %s2110 = scalar_lea.sflag [#allocation4], 1
    %2111 = vsyncpa %s2110, 1

</llo_original>
